<compile_context>
chip_gen: v7x
topology: tpu7x:2x2x1
jax: 0.10.0
libtpu: 0.0.40
codegen_flags: <defaults>
</compile_context>

<pallas_src>
import math
import functools

import jax
import jax.numpy as jnp
from jax.experimental import pallas as pl
from jax.experimental.pallas import tpu as pltpu


# ----------------------------------------------------------------------------
# Helpers
# ----------------------------------------------------------------------------

def _layer_norm(x, g, b, eps=1e-5):
    mu = jnp.mean(x, axis=-1, keepdims=True)
    var = jnp.mean((x - mu) * (x - mu), axis=-1, keepdims=True)
    return (x - mu) * jax.lax.rsqrt(var + eps) * g + b


# ----------------------------------------------------------------------------
# Encoder layer kernel (flash-style attention + fused FFN / post-norms)
# ----------------------------------------------------------------------------

def _encoder_layer_kernel(xq_ref, xkv_ref,
                          wq_ref, wk_ref, wv_ref, bq_ref, bk_ref, bv_ref,
                          wo_ref, bo_ref, ln1g_ref, ln1b_ref,
                          w1_ref, b1_ref, w2_ref, b2_ref,
                          ln2g_ref, ln2b_ref,
                          o_ref,
                          q_scr, k_scr, v_scr, acc_scr, m_scr, l_scr,
                          *, nheads):
    H = nheads
    tq = xq_ref.shape[1]
    tk = xkv_ref.shape[1]
    E = xq_ref.shape[2]
    dh = E // H
    scale = 1.0 / math.sqrt(dh)

    qi = pl.program_id(1)
    ki = pl.program_id(2)
    nk = pl.num_programs(2)
    q0 = qi * tq
    k0 = ki * tk

    @pl.when(ki == 0)
    def _init():
        xq = xq_ref[0].astype(jnp.bfloat16)                      # (tq, E)
        for h in range(H):                                       # per-head weight slab, no lane slicing
            qh = jnp.dot(xq, wq_ref[h],
                         preferred_element_type=jnp.float32) + bq_ref[h]
            q_scr[h] = qh.astype(jnp.bfloat16)
        m_scr[...] = jnp.full(m_scr.shape, -jnp.inf, jnp.float32)
        l_scr[...] = jnp.zeros(l_scr.shape, jnp.float32)
        acc_scr[...] = jnp.zeros(acc_scr.shape, jnp.float32)

    # Causal block-skip: only process KV blocks with at least one unmasked key.
    @pl.when(k0 <= q0 + (tq - 1))
    def _attend():
        xkv = xkv_ref[0].astype(jnp.bfloat16)                    # (tk, E)
        for h in range(H):
            kh = jnp.dot(xkv, wk_ref[h],
                         preferred_element_type=jnp.float32) + bk_ref[h]
            vh = jnp.dot(xkv, wv_ref[h],
                         preferred_element_type=jnp.float32) + bv_ref[h]
            k_scr[h] = kh.astype(jnp.bfloat16)
            v_scr[h] = vh.astype(jnp.bfloat16)

        # Head-batched score / context matmuls (fp32 accumulation).
        s = jnp.einsum('hqd,hkd->hqk', q_scr[...], k_scr[...],
                       preferred_element_type=jnp.float32) * scale
        # In-kernel causal mask (no (S,S) mask DMA).
        q_idx = q0 + jax.lax.broadcasted_iota(jnp.int32, (tq, tk), 0)
        k_idx = k0 + jax.lax.broadcasted_iota(jnp.int32, (tq, tk), 1)
        s = s + jnp.where(k_idx <= q_idx, 0.0, -1e30)[None, :, :]

        m_prev = m_scr[...]                                      # (H, tq, 1)
        m_new = jnp.maximum(m_prev, jnp.max(s, axis=-1, keepdims=True))
        alpha = jnp.exp(m_prev - m_new)
        p = jnp.exp(s - m_new)
        l_scr[...] = alpha * l_scr[...] + jnp.sum(p, axis=-1, keepdims=True)
        acc_scr[...] = alpha * acc_scr[...] + jnp.einsum(
            'hqk,hkd->hqd', p.astype(jnp.bfloat16), v_scr[...],
            preferred_element_type=jnp.float32)
        m_scr[...] = m_new

    @pl.when(ki == nk - 1)
    def _finalize():
        xq = xq_ref[0]                                           # (tq, E) fp32
        ctx = acc_scr[...] * pl.reciprocal(l_scr[...], approx=True)   # (H, tq, dh)
        ctx = ctx.astype(jnp.bfloat16)

        # Output projection folds the head-concat: sum of per-head partials.
        attn = jnp.dot(ctx[0], wo_ref[0], preferred_element_type=jnp.float32)
        for h in range(1, H):
            attn = attn + jnp.dot(ctx[h], wo_ref[h],
                                  preferred_element_type=jnp.float32)
        attn = attn + bo_ref[...]

        y = _layer_norm(xq + attn, ln1g_ref[...], ln1b_ref[...])

        h1 = jnp.dot(y.astype(jnp.bfloat16), w1_ref[...],
                     preferred_element_type=jnp.float32) + b1_ref[...]
        h1 = jnp.maximum(h1, 0.0)
        h2 = jnp.dot(h1.astype(jnp.bfloat16), w2_ref[...],
                     preferred_element_type=jnp.float32) + b2_ref[...]
        o_ref[0] = _layer_norm(y + h2, ln2g_ref[...], ln2b_ref[...])


def encoder_layer(x, lp, nheads, *, tq, tk):
    B, S, E = x.shape
    H = nheads
    dh = E // H
    Fh = lp["w1"].shape[1]
    assert S % tq == 0 and S % tk == 0
    nq, nk = S // tq, S // tk

    def rep(shape):
        n = len(shape)
        return pl.BlockSpec(shape, lambda b, qi, ki, _n=n: (0,) * _n)

    in_specs = [
        pl.BlockSpec((1, tq, E), lambda b, qi, ki: (b, qi, 0)),   # x: query block
        pl.BlockSpec((1, tk, E), lambda b, qi, ki: (b, ki, 0)),   # x: kv block
        rep((H, E, dh)), rep((H, E, dh)), rep((H, E, dh)),        # wq wk wv
        rep((H, 1, dh)), rep((H, 1, dh)), rep((H, 1, dh)),        # bq bk bv
        rep((H, dh, E)), rep((1, E)),                             # wo bo
        rep((1, E)), rep((1, E)),                                 # ln1 g/b
        rep((E, Fh)), rep((1, Fh)),                               # w1 b1
        rep((Fh, E)), rep((1, E)),                                # w2 b2
        rep((1, E)), rep((1, E)),                                 # ln2 g/b
    ]
    return pl.pallas_call(
        functools.partial(_encoder_layer_kernel, nheads=H),
        out_shape=jax.ShapeDtypeStruct((B, S, E), jnp.float32),
        grid_spec=pltpu.PrefetchScalarGridSpec(
            num_scalar_prefetch=0,
            grid=(B, nq, nk),
            in_specs=in_specs,
            out_specs=pl.BlockSpec((1, tq, E), lambda b, qi, ki: (b, qi, 0)),
            scratch_shapes=[
                pltpu.VMEM((H, tq, dh), jnp.bfloat16),   # q
                pltpu.VMEM((H, tk, dh), jnp.bfloat16),   # k
                pltpu.VMEM((H, tk, dh), jnp.bfloat16),   # v
                pltpu.VMEM((H, tq, dh), jnp.float32),    # acc
                pltpu.VMEM((H, tq, 1), jnp.float32),     # m
                pltpu.VMEM((H, tq, 1), jnp.float32),     # l
            ]),
        compiler_params=pltpu.CompilerParams(
            dimension_semantics=("parallel", "parallel", "arbitrary")),
    )(x, x,
      lp["wq"], lp["wk"], lp["wv"], lp["bq"], lp["bk"], lp["bv"],
      lp["wo"], lp["bo"], lp["ln1_g"], lp["ln1_b"],
      lp["w1"], lp["b1"], lp["w2"], lp["b2"],
      lp["ln2_g"], lp["ln2_b"])


# ----------------------------------------------------------------------------
# Tied decoder (tiled over rows and vocab, no weight transpose)
# ----------------------------------------------------------------------------

def _decoder_kernel(x_ref, w_ref, b_ref, o_ref):
    # x: (tn, E) fp32 ; w: (tv, E) bf16 (tied embedding, untransposed) ; b: (1, tv)
    o_ref[...] = jax.lax.dot_general(
        x_ref[...].astype(jnp.bfloat16), w_ref[...],
        (((1,), (1,)), ((), ())),
        preferred_element_type=jnp.float32) + b_ref[...]


def decoder(x2d, dec_w, dec_b, *, tn, tv):
    N, E = x2d.shape
    Vp = dec_w.shape[0]
    assert N % tn == 0 and Vp % tv == 0
    return pl.pallas_call(
        _decoder_kernel,
        out_shape=jax.ShapeDtypeStruct((N, Vp), jnp.float32),
        grid_spec=pltpu.PrefetchScalarGridSpec(
            num_scalar_prefetch=0,
            grid=(N // tn, Vp // tv),
            in_specs=[pl.BlockSpec((tn, E), lambda i, j: (i, 0)),
                      pl.BlockSpec((tv, E), lambda i, j: (j, 0)),
                      pl.BlockSpec((1, tv), lambda i, j: (0, j))],
            out_specs=pl.BlockSpec((tn, tv), lambda i, j: (i, j)),
        ),
        compiler_params=pltpu.CompilerParams(
            dimension_semantics=("parallel", "parallel")),
    )(x2d, dec_w, dec_b)


# ----------------------------------------------------------------------------
# Parameter construction (deterministic, synthetic)
# ----------------------------------------------------------------------------

def make_positional_encoding(max_len, d_model):
    position = jnp.arange(max_len, dtype=jnp.float32)[:, None]
    div_term = jnp.exp(jnp.arange(0, d_model, 2, dtype=jnp.float32)
                       * (-math.log(10000.0) / d_model))
    pe = jnp.zeros((max_len, d_model), jnp.float32)
    pe = pe.at[:, 0::2].set(jnp.sin(position * div_term))
    pe = pe.at[:, 1::2].set(jnp.cos(position * div_term))
    return pe


def init_params(key, vocab_size, emb, nheads, nlayers, ffn, max_len):
    dh = emb // nheads
    keys = jax.random.split(key, 1 + 6 * nlayers)
    ki = iter(keys)
    initrange = 0.001

    emb_tbl = jax.random.uniform(next(ki), (vocab_size, emb), jnp.float32,
                                 -initrange, initrange)
    # Tied decoder weight, vocab padded to a multiple of 128 (lane-dense stores).
    v_pad = ((vocab_size + 127) // 128) * 128
    dec_w = jnp.zeros((v_pad, emb), jnp.bfloat16)
    dec_w = dec_w.at[:vocab_size].set(emb_tbl.astype(jnp.bfloat16))

    params = {
        "emb": emb_tbl,
        "dec_w": dec_w,
        "dec_b": jnp.zeros((1, v_pad), jnp.float32),
        "pe": make_positional_encoding(max_len, emb),
        "layers": [],
    }
    s = 0.05
    for _ in range(nlayers):
        lp = {
            # per-head weight slabs: (H, E, dh) / (H, dh, E), bf16 matmul operands
            "wq": (s * jax.random.normal(next(ki), (nheads, emb, dh))).astype(jnp.bfloat16),
            "wk": (s * jax.random.normal(next(ki), (nheads, emb, dh))).astype(jnp.bfloat16),
            "wv": (s * jax.random.normal(next(ki), (nheads, emb, dh))).astype(jnp.bfloat16),
            "bq": jnp.zeros((nheads, 1, dh), jnp.float32),
            "bk": jnp.zeros((nheads, 1, dh), jnp.float32),
            "bv": jnp.zeros((nheads, 1, dh), jnp.float32),
            "wo": (s * jax.random.normal(next(ki), (nheads, dh, emb))).astype(jnp.bfloat16),
            "bo": jnp.zeros((1, emb), jnp.float32),
            "ln1_g": jnp.ones((1, emb), jnp.float32),
            "ln1_b": jnp.zeros((1, emb), jnp.float32),
            "w1": (s * jax.random.normal(next(ki), (emb, ffn))).astype(jnp.bfloat16),
            "b1": jnp.zeros((1, ffn), jnp.float32),
            "w2": (s * jax.random.normal(next(ki), (ffn, emb))).astype(jnp.bfloat16),
            "b2": jnp.zeros((1, emb), jnp.float32),
            "ln2_g": jnp.ones((1, emb), jnp.float32),
            "ln2_b": jnp.zeros((1, emb), jnp.float32),
        }
        params["layers"].append(lp)
    return params


# ----------------------------------------------------------------------------
# Full forward pass (== TransformerContextModel.forward, positional=True,
# has_mask=True, raw_out=False, embeddings=False, eval mode)
# ----------------------------------------------------------------------------

def transformer_context_model(tokens, params, nheads):
    # tokens: (seq, batch) int32 token ids
    S, B = tokens.shape
    emb_tbl = params["emb"]                       # (V, E) fp32
    V, E = emb_tbl.shape

    # Embedding lookup + sqrt(E) scale + positional add in plain JAX glue
    # (pure-bandwidth elementwise; dropout == identity).
    x = jnp.take(emb_tbl, tokens, axis=0)         # (S, B, E)
    x = jnp.transpose(x, (1, 0, 2))               # (B, S, E)
    x = x * math.sqrt(E) + params["pe"][:S][None, :, :]

    tq = 128 if S % 128 == 0 else S
    tk = tq
    for lp in params["layers"]:
        x = encoder_layer(x, lp, nheads, tq=tq, tk=tk)

    # Tied decoder: logits = h @ emb_tbl.T + b (computed against (V,E) directly)
    N = B * S
    h = x.reshape(N, E)
    Vp = params["dec_w"].shape[0]
    tn = 128 if N % 128 == 0 else N
    tv = 512 if Vp % 512 == 0 else (256 if Vp % 256 == 0 else 128)
    logits = decoder(h, params["dec_w"], params["dec_b"], tn=tn, tv=tv)  # (N, Vp)
    logits = logits[:, :V].reshape(B, S, V).transpose(1, 0, 2)           # (S, B, V)
    return logits


# ----------------------------------------------------------------------------
# Main
# ----------------------------------------------------------------------------

if __name__ == "__main__":
    SEQ, BATCH = 8, 2
    EMB, NHEADS, FFN, NLAYERS = 32, 2, 64, 2
    VOCAB, MAX_LEN = 64, 32

    key = jax.random.PRNGKey(0)
    pkey, tkey = jax.random.split(key)
    params = init_params(pkey, VOCAB, EMB, NHEADS, NLAYERS, FFN, MAX_LEN)
    tokens = jax.random.randint(tkey, (SEQ, BATCH), 0, VOCAB, dtype=jnp.int32)

    out = transformer_context_model(tokens, params, NHEADS)
    out = jax.block_until_ready(out)
    assert out.shape == (SEQ, BATCH, VOCAB)
    assert bool(jnp.all(jnp.isfinite(out)))
    print("KERNEL_OK")
</pallas_src>

<mosaic_0001>
module attributes {stable_mosaic.version = 11 : i64} {
  func.func @_encoder_layer_kernel(%arg0: i32, %arg1: i32, %arg2: i32, %arg3: memref<1x8x32xf32, #tpu.memory_space<vmem>>, %arg4: memref<1x8x32xf32, #tpu.memory_space<vmem>>, %arg5: memref<2x32x16xbf16, #tpu.memory_space<vmem>>, %arg6: memref<2x32x16xbf16, #tpu.memory_space<vmem>>, %arg7: memref<2x32x16xbf16, #tpu.memory_space<vmem>>, %arg8: memref<2x1x16xf32, #tpu.memory_space<vmem>>, %arg9: memref<2x1x16xf32, #tpu.memory_space<vmem>>, %arg10: memref<2x1x16xf32, #tpu.memory_space<vmem>>, %arg11: memref<2x16x32xbf16, #tpu.memory_space<vmem>>, %arg12: memref<1x32xf32, #tpu.memory_space<vmem>>, %arg13: memref<1x32xf32, #tpu.memory_space<vmem>>, %arg14: memref<1x32xf32, #tpu.memory_space<vmem>>, %arg15: memref<32x64xbf16, #tpu.memory_space<vmem>>, %arg16: memref<1x64xf32, #tpu.memory_space<vmem>>, %arg17: memref<64x32xbf16, #tpu.memory_space<vmem>>, %arg18: memref<1x32xf32, #tpu.memory_space<vmem>>, %arg19: memref<1x32xf32, #tpu.memory_space<vmem>>, %arg20: memref<1x32xf32, #tpu.memory_space<vmem>>, %arg21: memref<1x8x32xf32, #tpu.memory_space<vmem>>, %arg22: memref<2x8x16xbf16, #tpu.memory_space<vmem>>, %arg23: memref<2x8x16xbf16, #tpu.memory_space<vmem>>, %arg24: memref<2x8x16xbf16, #tpu.memory_space<vmem>>, %arg25: memref<2x8x16xf32, #tpu.memory_space<vmem>>, %arg26: memref<2x8x1xf32, #tpu.memory_space<vmem>>, %arg27: memref<2x8x1xf32, #tpu.memory_space<vmem>>) attributes {dimension_semantics = [#tpu.dimension_semantics<parallel>, #tpu.dimension_semantics<parallel>, #tpu.dimension_semantics<arbitrary>], iteration_bounds = array<i64: 2, 1, 1>, scalar_prefetch = 0 : i64, scratch_operands = 6 : i64, tpu.core_type = #tpu.core_type<tc>, window_params = [{transform_indices = @transform_0, window_bounds = array<i64: 1, 8, 32>}, {transform_indices = @transform_1, window_bounds = array<i64: 1, 8, 32>}, {pipeline_mode = #tpu.pipeline_mode<synchronous>, transform_indices = @transform_2, window_bounds = array<i64: 2, 32, 16>}, {pipeline_mode = #tpu.pipeline_mode<synchronous>, transform_indices = @transform_3, window_bounds = array<i64: 2, 32, 16>}, {pipeline_mode = #tpu.pipeline_mode<synchronous>, transform_indices = @transform_4, window_bounds = array<i64: 2, 32, 16>}, {pipeline_mode = #tpu.pipeline_mode<synchronous>, transform_indices = @transform_5, window_bounds = array<i64: 2, 1, 16>}, {pipeline_mode = #tpu.pipeline_mode<synchronous>, transform_indices = @transform_6, window_bounds = array<i64: 2, 1, 16>}, {pipeline_mode = #tpu.pipeline_mode<synchronous>, transform_indices = @transform_7, window_bounds = array<i64: 2, 1, 16>}, {pipeline_mode = #tpu.pipeline_mode<synchronous>, transform_indices = @transform_8, window_bounds = array<i64: 2, 16, 32>}, {pipeline_mode = #tpu.pipeline_mode<synchronous>, transform_indices = @transform_9, window_bounds = array<i64: 1, 32>}, {pipeline_mode = #tpu.pipeline_mode<synchronous>, transform_indices = @transform_10, window_bounds = array<i64: 1, 32>}, {pipeline_mode = #tpu.pipeline_mode<synchronous>, transform_indices = @transform_11, window_bounds = array<i64: 1, 32>}, {pipeline_mode = #tpu.pipeline_mode<synchronous>, transform_indices = @transform_12, window_bounds = array<i64: 32, 64>}, {pipeline_mode = #tpu.pipeline_mode<synchronous>, transform_indices = @transform_13, window_bounds = array<i64: 1, 64>}, {pipeline_mode = #tpu.pipeline_mode<synchronous>, transform_indices = @transform_14, window_bounds = array<i64: 64, 32>}, {pipeline_mode = #tpu.pipeline_mode<synchronous>, transform_indices = @transform_15, window_bounds = array<i64: 1, 32>}, {pipeline_mode = #tpu.pipeline_mode<synchronous>, transform_indices = @transform_16, window_bounds = array<i64: 1, 32>}, {pipeline_mode = #tpu.pipeline_mode<synchronous>, transform_indices = @transform_17, window_bounds = array<i64: 1, 32>}, {transform_indices = @transform_18, window_bounds = array<i64: 1, 8, 32>}]} {
    %c8_i32 = arith.constant 8 : i32
    %0 = arith.muli %arg1, %c8_i32 : i32
    %c8_i32_0 = arith.constant 8 : i32
    %1 = arith.muli %arg2, %c8_i32_0 : i32
    %c0_i32 = arith.constant 0 : i32
    %2 = arith.cmpi eq, %arg2, %c0_i32 : i32
    %3 = arith.extui %2 : i1 to i32
    %c0_i32_1 = arith.constant 0 : i32
    %4 = arith.cmpi ne, %3, %c0_i32_1 : i32
    scf.if %4 {
      %c0 = arith.constant 0 : index
      %c0_5 = arith.constant 0 : index
      %c0_6 = arith.constant 0 : index
      %12 = vector.load %arg3[%c0, %c0_5, %c0_6] : memref<1x8x32xf32, #tpu.memory_space<vmem>>, vector<1x8x32xf32>
      %13 = vector.shape_cast %12 : vector<1x8x32xf32> to vector<8x32xf32>
      %14 = arith.truncf %13 : vector<8x32xf32> to vector<8x32xbf16>
      %c0_7 = arith.constant 0 : index
      %c0_8 = arith.constant 0 : index
      %c0_9 = arith.constant 0 : index
      %15 = vector.load %arg5[%c0_7, %c0_8, %c0_9] : memref<2x32x16xbf16, #tpu.memory_space<vmem>>, vector<1x32x16xbf16>
      %16 = vector.shape_cast %15 : vector<1x32x16xbf16> to vector<32x16xbf16>
      %cst = arith.constant dense<0.000000e+00> : vector<8x16xf32>
      %17 = tpu.matmul %14, %16, %cst {dimension_numbers = #tpu.dot_dimension_numbers<[1], [0], [0], [1], [0, 0, 1, 1], [], []>} : vector<8x32xbf16>, vector<32x16xbf16>, vector<8x16xf32> -> vector<8x16xf32>
      %c0_10 = arith.constant 0 : index
      %c0_11 = arith.constant 0 : index
      %c0_12 = arith.constant 0 : index
      %18 = vector.load %arg8[%c0_10, %c0_11, %c0_12] : memref<2x1x16xf32, #tpu.memory_space<vmem>>, vector<1x1x16xf32>
      %19 = vector.shape_cast %18 : vector<1x1x16xf32> to vector<1x16xf32>
      %20 = vector.broadcast %19 : vector<1x16xf32> to vector<8x16xf32>
      %21 = arith.addf %17, %20 : vector<8x16xf32>
      %22 = arith.truncf %21 : vector<8x16xf32> to vector<8x16xbf16>
      %c0_13 = arith.constant 0 : index
      %c0_14 = arith.constant 0 : index
      %c0_15 = arith.constant 0 : index
      %23 = vector.load %arg22[%c0_13, %c0_14, %c0_15] : memref<2x8x16xbf16, #tpu.memory_space<vmem>>, vector<1x8x16xbf16>
      %24 = vector.shape_cast %23 : vector<1x8x16xbf16> to vector<8x16xbf16>
      %25 = vector.shape_cast %22 : vector<8x16xbf16> to vector<1x8x16xbf16>
      tpu.vector_store %arg22[%c0_13, %c0_14, %c0_15], %25 {strides = array<i32>} : memref<2x8x16xbf16, #tpu.memory_space<vmem>>, vector<1x8x16xbf16>,
      %c1 = arith.constant 1 : index
      %c0_16 = arith.constant 0 : index
      %c0_17 = arith.constant 0 : index
      %26 = vector.load %arg5[%c1, %c0_16, %c0_17] : memref<2x32x16xbf16, #tpu.memory_space<vmem>>, vector<1x32x16xbf16>
      %27 = vector.shape_cast %26 : vector<1x32x16xbf16> to vector<32x16xbf16>
      %cst_18 = arith.constant dense<0.000000e+00> : vector<8x16xf32>
      %28 = tpu.matmul %14, %27, %cst_18 {dimension_numbers = #tpu.dot_dimension_numbers<[1], [0], [0], [1], [0, 0, 1, 1], [], []>} : vector<8x32xbf16>, vector<32x16xbf16>, vector<8x16xf32> -> vector<8x16xf32>
      %c1_19 = arith.constant 1 : index
      %c0_20 = arith.constant 0 : index
      %c0_21 = arith.constant 0 : index
      %29 = vector.load %arg8[%c1_19, %c0_20, %c0_21] : memref<2x1x16xf32, #tpu.memory_space<vmem>>, vector<1x1x16xf32>
      %30 = vector.shape_cast %29 : vector<1x1x16xf32> to vector<1x16xf32>
      %31 = vector.broadcast %30 : vector<1x16xf32> to vector<8x16xf32>
      %32 = arith.addf %28, %31 : vector<8x16xf32>
      %33 = arith.truncf %32 : vector<8x16xf32> to vector<8x16xbf16>
      %c1_22 = arith.constant 1 : index
      %c0_23 = arith.constant 0 : index
      %c0_24 = arith.constant 0 : index
      %34 = vector.load %arg22[%c1_22, %c0_23, %c0_24] : memref<2x8x16xbf16, #tpu.memory_space<vmem>>, vector<1x8x16xbf16>
      %35 = vector.shape_cast %34 : vector<1x8x16xbf16> to vector<8x16xbf16>
      %36 = vector.shape_cast %33 : vector<8x16xbf16> to vector<1x8x16xbf16>
      tpu.vector_store %arg22[%c1_22, %c0_23, %c0_24], %36 {strides = array<i32>} : memref<2x8x16xbf16, #tpu.memory_space<vmem>>, vector<1x8x16xbf16>,
      %cst_25 = arith.constant 0xFF800000 : f32
      %37 = vector.broadcast %cst_25 : f32 to vector<2x8x1xf32>
      %c0_26 = arith.constant 0 : index
      %c0_27 = arith.constant 0 : index
      %c0_28 = arith.constant 0 : index
      %38 = vector.load %arg26[%c0_26, %c0_27, %c0_28] : memref<2x8x1xf32, #tpu.memory_space<vmem>>, vector<2x8x1xf32>
      tpu.vector_store %arg26[%c0_26, %c0_27, %c0_28], %37 {strides = array<i32>} : memref<2x8x1xf32, #tpu.memory_space<vmem>>, vector<2x8x1xf32>,
      %cst_29 = arith.constant 0.000000e+00 : f32
      %39 = vector.broadcast %cst_29 : f32 to vector<2x8x1xf32>
      %c0_30 = arith.constant 0 : index
      %c0_31 = arith.constant 0 : index
      %c0_32 = arith.constant 0 : index
      %40 = vector.load %arg27[%c0_30, %c0_31, %c0_32] : memref<2x8x1xf32, #tpu.memory_space<vmem>>, vector<2x8x1xf32>
      tpu.vector_store %arg27[%c0_30, %c0_31, %c0_32], %39 {strides = array<i32>} : memref<2x8x1xf32, #tpu.memory_space<vmem>>, vector<2x8x1xf32>,
      %cst_33 = arith.constant 0.000000e+00 : f32
      %41 = vector.broadcast %cst_33 : f32 to vector<2x8x16xf32>
      %c0_34 = arith.constant 0 : index
      %c0_35 = arith.constant 0 : index
      %c0_36 = arith.constant 0 : index
      %42 = vector.load %arg25[%c0_34, %c0_35, %c0_36] : memref<2x8x16xf32, #tpu.memory_space<vmem>>, vector<2x8x16xf32>
      tpu.vector_store %arg25[%c0_34, %c0_35, %c0_36], %41 {strides = array<i32>} : memref<2x8x16xf32, #tpu.memory_space<vmem>>, vector<2x8x16xf32>,
    } else {
    }
    %c7_i32 = arith.constant 7 : i32
    %5 = arith.addi %0, %c7_i32 : i32
    %6 = arith.cmpi sle, %1, %5 : i32
    %7 = arith.extui %6 : i1 to i32
    %c0_i32_2 = arith.constant 0 : i32
    %8 = arith.cmpi ne, %7, %c0_i32_2 : i32
    scf.if %8 {
      %c0 = arith.constant 0 : index
      %c0_5 = arith.constant 0 : index
      %c0_6 = arith.constant 0 : index
      %12 = vector.load %arg4[%c0, %c0_5, %c0_6] : memref<1x8x32xf32, #tpu.memory_space<vmem>>, vector<1x8x32xf32>
      %13 = vector.shape_cast %12 : vector<1x8x32xf32> to vector<8x32xf32>
      %14 = arith.truncf %13 : vector<8x32xf32> to vector<8x32xbf16>
      %c0_7 = arith.constant 0 : index
      %c0_8 = arith.constant 0 : index
      %c0_9 = arith.constant 0 : index
      %15 = vector.load %arg6[%c0_7, %c0_8, %c0_9] : memref<2x32x16xbf16, #tpu.memory_space<vmem>>, vector<1x32x16xbf16>
      %16 = vector.shape_cast %15 : vector<1x32x16xbf16> to vector<32x16xbf16>
      %cst = arith.constant dense<0.000000e+00> : vector<8x16xf32>
      %17 = tpu.matmul %14, %16, %cst {dimension_numbers = #tpu.dot_dimension_numbers<[1], [0], [0], [1], [0, 0, 1, 1], [], []>} : vector<8x32xbf16>, vector<32x16xbf16>, vector<8x16xf32> -> vector<8x16xf32>
      %c0_10 = arith.constant 0 : index
      %c0_11 = arith.constant 0 : index
      %c0_12 = arith.constant 0 : index
      %18 = vector.load %arg9[%c0_10, %c0_11, %c0_12] : memref<2x1x16xf32, #tpu.memory_space<vmem>>, vector<1x1x16xf32>
      %19 = vector.shape_cast %18 : vector<1x1x16xf32> to vector<1x16xf32>
      %20 = vector.broadcast %19 : vector<1x16xf32> to vector<8x16xf32>
      %21 = arith.addf %17, %20 : vector<8x16xf32>
      %c0_13 = arith.constant 0 : index
      %c0_14 = arith.constant 0 : index
      %c0_15 = arith.constant 0 : index
      %22 = vector.load %arg7[%c0_13, %c0_14, %c0_15] : memref<2x32x16xbf16, #tpu.memory_space<vmem>>, vector<1x32x16xbf16>
      %23 = vector.shape_cast %22 : vector<1x32x16xbf16> to vector<32x16xbf16>
      %cst_16 = arith.constant dense<0.000000e+00> : vector<8x16xf32>
      %24 = tpu.matmul %14, %23, %cst_16 {dimension_numbers = #tpu.dot_dimension_numbers<[1], [0], [0], [1], [0, 0, 1, 1], [], []>} : vector<8x32xbf16>, vector<32x16xbf16>, vector<8x16xf32> -> vector<8x16xf32>
      %c0_17 = arith.constant 0 : index
      %c0_18 = arith.constant 0 : index
      %c0_19 = arith.constant 0 : index
      %25 = vector.load %arg10[%c0_17, %c0_18, %c0_19] : memref<2x1x16xf32, #tpu.memory_space<vmem>>, vector<1x1x16xf32>
      %26 = vector.shape_cast %25 : vector<1x1x16xf32> to vector<1x16xf32>
      %27 = vector.broadcast %26 : vector<1x16xf32> to vector<8x16xf32>
      %28 = arith.addf %24, %27 : vector<8x16xf32>
      %29 = arith.truncf %21 : vector<8x16xf32> to vector<8x16xbf16>
      %c0_20 = arith.constant 0 : index
      %c0_21 = arith.constant 0 : index
      %c0_22 = arith.constant 0 : index
      %30 = vector.load %arg23[%c0_20, %c0_21, %c0_22] : memref<2x8x16xbf16, #tpu.memory_space<vmem>>, vector<1x8x16xbf16>
      %31 = vector.shape_cast %30 : vector<1x8x16xbf16> to vector<8x16xbf16>
      %32 = vector.shape_cast %29 : vector<8x16xbf16> to vector<1x8x16xbf16>
      tpu.vector_store %arg23[%c0_20, %c0_21, %c0_22], %32 {strides = array<i32>} : memref<2x8x16xbf16, #tpu.memory_space<vmem>>, vector<1x8x16xbf16>,
      %33 = arith.truncf %28 : vector<8x16xf32> to vector<8x16xbf16>
      %c0_23 = arith.constant 0 : index
      %c0_24 = arith.constant 0 : index
      %c0_25 = arith.constant 0 : index
      %34 = vector.load %arg24[%c0_23, %c0_24, %c0_25] : memref<2x8x16xbf16, #tpu.memory_space<vmem>>, vector<1x8x16xbf16>
      %35 = vector.shape_cast %34 : vector<1x8x16xbf16> to vector<8x16xbf16>
      %36 = vector.shape_cast %33 : vector<8x16xbf16> to vector<1x8x16xbf16>
      tpu.vector_store %arg24[%c0_23, %c0_24, %c0_25], %36 {strides = array<i32>} : memref<2x8x16xbf16, #tpu.memory_space<vmem>>, vector<1x8x16xbf16>,
      %c1 = arith.constant 1 : index
      %c0_26 = arith.constant 0 : index
      %c0_27 = arith.constant 0 : index
      %37 = vector.load %arg6[%c1, %c0_26, %c0_27] : memref<2x32x16xbf16, #tpu.memory_space<vmem>>, vector<1x32x16xbf16>
      %38 = vector.shape_cast %37 : vector<1x32x16xbf16> to vector<32x16xbf16>
      %cst_28 = arith.constant dense<0.000000e+00> : vector<8x16xf32>
      %39 = tpu.matmul %14, %38, %cst_28 {dimension_numbers = #tpu.dot_dimension_numbers<[1], [0], [0], [1], [0, 0, 1, 1], [], []>} : vector<8x32xbf16>, vector<32x16xbf16>, vector<8x16xf32> -> vector<8x16xf32>
      %c1_29 = arith.constant 1 : index
      %c0_30 = arith.constant 0 : index
      %c0_31 = arith.constant 0 : index
      %40 = vector.load %arg9[%c1_29, %c0_30, %c0_31] : memref<2x1x16xf32, #tpu.memory_space<vmem>>, vector<1x1x16xf32>
      %41 = vector.shape_cast %40 : vector<1x1x16xf32> to vector<1x16xf32>
      %42 = vector.broadcast %41 : vector<1x16xf32> to vector<8x16xf32>
      %43 = arith.addf %39, %42 : vector<8x16xf32>
      %c1_32 = arith.constant 1 : index
      %c0_33 = arith.constant 0 : index
      %c0_34 = arith.constant 0 : index
      %44 = vector.load %arg7[%c1_32, %c0_33, %c0_34] : memref<2x32x16xbf16, #tpu.memory_space<vmem>>, vector<1x32x16xbf16>
      %45 = vector.shape_cast %44 : vector<1x32x16xbf16> to vector<32x16xbf16>
      %cst_35 = arith.constant dense<0.000000e+00> : vector<8x16xf32>
      %46 = tpu.matmul %14, %45, %cst_35 {dimension_numbers = #tpu.dot_dimension_numbers<[1], [0], [0], [1], [0, 0, 1, 1], [], []>} : vector<8x32xbf16>, vector<32x16xbf16>, vector<8x16xf32> -> vector<8x16xf32>
      %c1_36 = arith.constant 1 : index
      %c0_37 = arith.constant 0 : index
      %c0_38 = arith.constant 0 : index
      %47 = vector.load %arg10[%c1_36, %c0_37, %c0_38] : memref<2x1x16xf32, #tpu.memory_space<vmem>>, vector<1x1x16xf32>
      %48 = vector.shape_cast %47 : vector<1x1x16xf32> to vector<1x16xf32>
      %49 = vector.broadcast %48 : vector<1x16xf32> to vector<8x16xf32>
      %50 = arith.addf %46, %49 : vector<8x16xf32>
      %51 = arith.truncf %43 : vector<8x16xf32> to vector<8x16xbf16>
      %c1_39 = arith.constant 1 : index
      %c0_40 = arith.constant 0 : index
      %c0_41 = arith.constant 0 : index
      %52 = vector.load %arg23[%c1_39, %c0_40, %c0_41] : memref<2x8x16xbf16, #tpu.memory_space<vmem>>, vector<1x8x16xbf16>
      %53 = vector.shape_cast %52 : vector<1x8x16xbf16> to vector<8x16xbf16>
      %54 = vector.shape_cast %51 : vector<8x16xbf16> to vector<1x8x16xbf16>
      tpu.vector_store %arg23[%c1_39, %c0_40, %c0_41], %54 {strides = array<i32>} : memref<2x8x16xbf16, #tpu.memory_space<vmem>>, vector<1x8x16xbf16>,
      %55 = arith.truncf %50 : vector<8x16xf32> to vector<8x16xbf16>
      %c1_42 = arith.constant 1 : index
      %c0_43 = arith.constant 0 : index
      %c0_44 = arith.constant 0 : index
      %56 = vector.load %arg24[%c1_42, %c0_43, %c0_44] : memref<2x8x16xbf16, #tpu.memory_space<vmem>>, vector<1x8x16xbf16>
      %57 = vector.shape_cast %56 : vector<1x8x16xbf16> to vector<8x16xbf16>
      %58 = vector.shape_cast %55 : vector<8x16xbf16> to vector<1x8x16xbf16>
      tpu.vector_store %arg24[%c1_42, %c0_43, %c0_44], %58 {strides = array<i32>} : memref<2x8x16xbf16, #tpu.memory_space<vmem>>, vector<1x8x16xbf16>,
      %c0_45 = arith.constant 0 : index
      %c0_46 = arith.constant 0 : index
      %c0_47 = arith.constant 0 : index
      %59 = vector.load %arg22[%c0_45, %c0_46, %c0_47] : memref<2x8x16xbf16, #tpu.memory_space<vmem>>, vector<2x8x16xbf16>
      %c0_48 = arith.constant 0 : index
      %c0_49 = arith.constant 0 : index
      %c0_50 = arith.constant 0 : index
      %60 = vector.load %arg23[%c0_48, %c0_49, %c0_50] : memref<2x8x16xbf16, #tpu.memory_space<vmem>>, vector<2x8x16xbf16>
      "tpu.trace_start"() <{level = 10 : i32, message = "hqd,hkd->hqk"}> : () -> ()
      %cst_51 = arith.constant dense<0.000000e+00> : vector<2x8x8xf32>
      %61 = tpu.matmul %59, %60, %cst_51 {dimension_numbers = #tpu.dot_dimension_numbers<[2], [2], [1], [1], [0, 0, 0, 1, 1, 1], [0], [0]>} : vector<2x8x16xbf16>, vector<2x8x16xbf16>, vector<2x8x8xf32> -> vector<2x8x8xf32>
      "tpu.trace_stop"() : () -> ()
      %cst_52 = arith.constant 2.500000e-01 : f32
      %62 = vector.broadcast %cst_52 : f32 to vector<2x8x8xf32>
      %63 = arith.mulf %61, %62 : vector<2x8x8xf32>
      %64 = tpu.iota {dimensions = array<i32: 0>} : vector<8x8xi32>
      %65 = vector.broadcast %0 : i32 to vector<8x8xi32>
      %66 = arith.addi %65, %64 : vector<8x8xi32>
      %67 = tpu.iota {dimensions = array<i32: 1>} : vector<8x8xi32>
      %68 = vector.broadcast %1 : i32 to vector<8x8xi32>
      %69 = arith.addi %68, %67 : vector<8x8xi32>
      %70 = arith.cmpi sle, %69, %66 : vector<8x8xi32>
      %cst_53 = arith.constant 0.000000e+00 : f32
      %cst_54 = arith.constant -1.000000e+30 : f32
      %71 = vector.broadcast %cst_53 : f32 to vector<8x8xf32>
      %72 = vector.broadcast %cst_54 : f32 to vector<8x8xf32>
      %73 = arith.select %70, %71, %72 : vector<8x8xi1>, vector<8x8xf32>
      %74 = vector.shape_cast %73 : vector<8x8xf32> to vector<1x8x8xf32>
      %75 = vector.broadcast %74 : vector<1x8x8xf32> to vector<2x8x8xf32>
      %76 = arith.addf %63, %75 : vector<2x8x8xf32>
      %c0_55 = arith.constant 0 : index
      %c0_56 = arith.constant 0 : index
      %c0_57 = arith.constant 0 : index
      %77 = vector.load %arg26[%c0_55, %c0_56, %c0_57] : memref<2x8x1xf32, #tpu.memory_space<vmem>>, vector<2x8x1xf32>
      %cst_58 = arith.constant dense<0xFF800000> : vector<2x8xf32>
      %78 = vector.multi_reduction <maximumf>, %76, %cst_58 [2] : vector<2x8x8xf32> to vector<2x8xf32>
      %79 = vector.shape_cast %78 : vector<2x8xf32> to vector<2x8x1xf32>
      %80 = arith.maximumf %77, %79 : vector<2x8x1xf32>
      %81 = arith.subf %77, %80 : vector<2x8x1xf32>
      %82 = math.exp %81 : vector<2x8x1xf32>
      %83 = vector.broadcast %80 : vector<2x8x1xf32> to vector<2x8x8xf32>
      %84 = arith.subf %76, %83 : vector<2x8x8xf32>
      %85 = math.exp %84 : vector<2x8x8xf32>
      %c0_59 = arith.constant 0 : index
      %c0_60 = arith.constant 0 : index
      %c0_61 = arith.constant 0 : index
      %86 = vector.load %arg27[%c0_59, %c0_60, %c0_61] : memref<2x8x1xf32, #tpu.memory_space<vmem>>, vector<2x8x1xf32>
      %87 = arith.mulf %82, %86 : vector<2x8x1xf32>
      %cst_62 = arith.constant dense<0.000000e+00> : vector<2x8xf32>
      %88 = vector.multi_reduction <add>, %85, %cst_62 [2] : vector<2x8x8xf32> to vector<2x8xf32>
      %89 = vector.shape_cast %88 : vector<2x8xf32> to vector<2x8x1xf32>
      %90 = arith.addf %87, %89 : vector<2x8x1xf32>
      %c0_63 = arith.constant 0 : index
      %c0_64 = arith.constant 0 : index
      %c0_65 = arith.constant 0 : index
      %91 = vector.load %arg27[%c0_63, %c0_64, %c0_65] : memref<2x8x1xf32, #tpu.memory_space<vmem>>, vector<2x8x1xf32>
      tpu.vector_store %arg27[%c0_63, %c0_64, %c0_65], %90 {strides = array<i32>} : memref<2x8x1xf32, #tpu.memory_space<vmem>>, vector<2x8x1xf32>,
      %c0_66 = arith.constant 0 : index
      %c0_67 = arith.constant 0 : index
      %c0_68 = arith.constant 0 : index
      %92 = vector.load %arg25[%c0_66, %c0_67, %c0_68] : memref<2x8x16xf32, #tpu.memory_space<vmem>>, vector<2x8x16xf32>
      %93 = vector.broadcast %82 : vector<2x8x1xf32> to vector<2x8x16xf32>
      %94 = arith.mulf %93, %92 : vector<2x8x16xf32>
      %95 = arith.truncf %85 : vector<2x8x8xf32> to vector<2x8x8xbf16>
      %c0_69 = arith.constant 0 : index
      %c0_70 = arith.constant 0 : index
      %c0_71 = arith.constant 0 : index
      %96 = vector.load %arg24[%c0_69, %c0_70, %c0_71] : memref<2x8x16xbf16, #tpu.memory_space<vmem>>, vector<2x8x16xbf16>
      "tpu.trace_start"() <{level = 10 : i32, message = "hqk,hkd->hqd"}> : () -> ()
      %cst_72 = arith.constant dense<0.000000e+00> : vector<2x8x16xf32>
      %97 = tpu.matmul %95, %96, %cst_72 {dimension_numbers = #tpu.dot_dimension_numbers<[2], [1], [1], [2], [0, 0, 0, 1, 1, 2], [0], [0]>} : vector<2x8x8xbf16>, vector<2x8x16xbf16>, vector<2x8x16xf32> -> vector<2x8x16xf32>
      "tpu.trace_stop"() : () -> ()
      %98 = arith.addf %94, %97 : vector<2x8x16xf32>
      %c0_73 = arith.constant 0 : index
      %c0_74 = arith.constant 0 : index
      %c0_75 = arith.constant 0 : index
      %99 = vector.load %arg25[%c0_73, %c0_74, %c0_75] : memref<2x8x16xf32, #tpu.memory_space<vmem>>, vector<2x8x16xf32>
      tpu.vector_store %arg25[%c0_73, %c0_74, %c0_75], %98 {strides = array<i32>} : memref<2x8x16xf32, #tpu.memory_space<vmem>>, vector<2x8x16xf32>,
      %c0_76 = arith.constant 0 : index
      %c0_77 = arith.constant 0 : index
      %c0_78 = arith.constant 0 : index
      %100 = vector.load %arg26[%c0_76, %c0_77, %c0_78] : memref<2x8x1xf32, #tpu.memory_space<vmem>>, vector<2x8x1xf32>
      tpu.vector_store %arg26[%c0_76, %c0_77, %c0_78], %80 {strides = array<i32>} : memref<2x8x1xf32, #tpu.memory_space<vmem>>, vector<2x8x1xf32>,
    } else {
    }
    %c0_i32_3 = arith.constant 0 : i32
    %9 = arith.cmpi eq, %arg2, %c0_i32_3 : i32
    %10 = arith.extui %9 : i1 to i32
    %c0_i32_4 = arith.constant 0 : i32
    %11 = arith.cmpi ne, %10, %c0_i32_4 : i32
    scf.if %11 {
      %c0 = arith.constant 0 : index
      %c0_5 = arith.constant 0 : index
      %c0_6 = arith.constant 0 : index
      %12 = vector.load %arg3[%c0, %c0_5, %c0_6] : memref<1x8x32xf32, #tpu.memory_space<vmem>>, vector<1x8x32xf32>
      %13 = vector.shape_cast %12 : vector<1x8x32xf32> to vector<8x32xf32>
      %c0_7 = arith.constant 0 : index
      %c0_8 = arith.constant 0 : index
      %c0_9 = arith.constant 0 : index
      %14 = vector.load %arg25[%c0_7, %c0_8, %c0_9] : memref<2x8x16xf32, #tpu.memory_space<vmem>>, vector<2x8x16xf32>
      %c0_10 = arith.constant 0 : index
      %c0_11 = arith.constant 0 : index
      %c0_12 = arith.constant 0 : index
      %15 = vector.load %arg27[%c0_10, %c0_11, %c0_12] : memref<2x8x1xf32, #tpu.memory_space<vmem>>, vector<2x8x1xf32>
      %16 = tpu.reciprocal %15 {approx = true} : vector<2x8x1xf32> -> vector<2x8x1xf32>
      %17 = vector.broadcast %16 : vector<2x8x1xf32> to vector<2x8x16xf32>
      %18 = arith.mulf %14, %17 : vector<2x8x16xf32>
      %19 = arith.truncf %18 : vector<2x8x16xf32> to vector<2x8x16xbf16>
      %20 = vector.extract_strided_slice %19 {offsets = [0, 0, 0], sizes = [1, 8, 16], strides = [1, 1, 1]} : vector<2x8x16xbf16> to vector<1x8x16xbf16>
      %21 = vector.shape_cast %20 : vector<1x8x16xbf16> to vector<8x16xbf16>
      %c0_13 = arith.constant 0 : index
      %c0_14 = arith.constant 0 : index
      %c0_15 = arith.constant 0 : index
      %22 = vector.load %arg11[%c0_13, %c0_14, %c0_15] : memref<2x16x32xbf16, #tpu.memory_space<vmem>>, vector<1x16x32xbf16>
      %23 = vector.shape_cast %22 : vector<1x16x32xbf16> to vector<16x32xbf16>
      %cst = arith.constant dense<0.000000e+00> : vector<8x32xf32>
      %24 = tpu.matmul %21, %23, %cst {dimension_numbers = #tpu.dot_dimension_numbers<[1], [0], [0], [1], [0, 0, 1, 1], [], []>} : vector<8x16xbf16>, vector<16x32xbf16>, vector<8x32xf32> -> vector<8x32xf32>
      %25 = vector.extract_strided_slice %19 {offsets = [1, 0, 0], sizes = [1, 8, 16], strides = [1, 1, 1]} : vector<2x8x16xbf16> to vector<1x8x16xbf16>
      %26 = vector.shape_cast %25 : vector<1x8x16xbf16> to vector<8x16xbf16>
      %c1 = arith.constant 1 : index
      %c0_16 = arith.constant 0 : index
      %c0_17 = arith.constant 0 : index
      %27 = vector.load %arg11[%c1, %c0_16, %c0_17] : memref<2x16x32xbf16, #tpu.memory_space<vmem>>, vector<1x16x32xbf16>
      %28 = vector.shape_cast %27 : vector<1x16x32xbf16> to vector<16x32xbf16>
      %cst_18 = arith.constant dense<0.000000e+00> : vector<8x32xf32>
      %29 = tpu.matmul %26, %28, %cst_18 {dimension_numbers = #tpu.dot_dimension_numbers<[1], [0], [0], [1], [0, 0, 1, 1], [], []>} : vector<8x16xbf16>, vector<16x32xbf16>, vector<8x32xf32> -> vector<8x32xf32>
      %30 = arith.addf %24, %29 : vector<8x32xf32>
      %c0_19 = arith.constant 0 : index
      %c0_20 = arith.constant 0 : index
      %31 = vector.load %arg12[%c0_19, %c0_20] : memref<1x32xf32, #tpu.memory_space<vmem>>, vector<1x32xf32>
      %32 = vector.broadcast %31 : vector<1x32xf32> to vector<8x32xf32>
      %33 = arith.addf %30, %32 : vector<8x32xf32>
      %34 = arith.addf %13, %33 : vector<8x32xf32>
      %c0_21 = arith.constant 0 : index
      %c0_22 = arith.constant 0 : index
      %35 = vector.load %arg13[%c0_21, %c0_22] : memref<1x32xf32, #tpu.memory_space<vmem>>, vector<1x32xf32>
      %c0_23 = arith.constant 0 : index
      %c0_24 = arith.constant 0 : index
      %36 = vector.load %arg14[%c0_23, %c0_24] : memref<1x32xf32, #tpu.memory_space<vmem>>, vector<1x32xf32>
      %cst_25 = arith.constant dense<0.000000e+00> : vector<8xf32>
      %37 = vector.multi_reduction <add>, %34, %cst_25 [1] : vector<8x32xf32> to vector<8xf32>
      %38 = vector.shape_cast %37 : vector<8xf32> to vector<8x1xf32>
      %cst_26 = arith.constant 3.200000e+01 : f32
      %39 = vector.broadcast %cst_26 : f32 to vector<8x1xf32>
      %40 = arith.divf %38, %39 : vector<8x1xf32>
      %41 = vector.broadcast %40 : vector<8x1xf32> to vector<8x32xf32>
      %42 = arith.subf %34, %41 : vector<8x32xf32>
      %43 = vector.broadcast %40 : vector<8x1xf32> to vector<8x32xf32>
      %44 = arith.subf %34, %43 : vector<8x32xf32>
      %45 = arith.mulf %42, %44 : vector<8x32xf32>
      %cst_27 = arith.constant dense<0.000000e+00> : vector<8xf32>
      %46 = vector.multi_reduction <add>, %45, %cst_27 [1] : vector<8x32xf32> to vector<8xf32>
      %47 = vector.shape_cast %46 : vector<8xf32> to vector<8x1xf32>
      %cst_28 = arith.constant 3.200000e+01 : f32
      %48 = vector.broadcast %cst_28 : f32 to vector<8x1xf32>
      %49 = arith.divf %47, %48 : vector<8x1xf32>
      %50 = vector.broadcast %40 : vector<8x1xf32> to vector<8x32xf32>
      %51 = arith.subf %34, %50 : vector<8x32xf32>
      %cst_29 = arith.constant 9.99999974E-6 : f32
      %52 = vector.broadcast %cst_29 : f32 to vector<8x1xf32>
      %53 = arith.addf %49, %52 : vector<8x1xf32>
      %54 = math.rsqrt %53 : vector<8x1xf32>
      %55 = vector.broadcast %54 : vector<8x1xf32> to vector<8x32xf32>
      %56 = arith.mulf %51, %55 : vector<8x32xf32>
      %57 = vector.broadcast %35 : vector<1x32xf32> to vector<8x32xf32>
      %58 = arith.mulf %56, %57 : vector<8x32xf32>
      %59 = vector.broadcast %36 : vector<1x32xf32> to vector<8x32xf32>
      %60 = arith.addf %58, %59 : vector<8x32xf32>
      %61 = arith.truncf %60 : vector<8x32xf32> to vector<8x32xbf16>
      %c0_30 = arith.constant 0 : index
      %c0_31 = arith.constant 0 : index
      %62 = vector.load %arg15[%c0_30, %c0_31] : memref<32x64xbf16, #tpu.memory_space<vmem>>, vector<32x64xbf16>
      %cst_32 = arith.constant dense<0.000000e+00> : vector<8x64xf32>
      %63 = tpu.matmul %61, %62, %cst_32 {dimension_numbers = #tpu.dot_dimension_numbers<[1], [0], [0], [1], [0, 0, 1, 1], [], []>} : vector<8x32xbf16>, vector<32x64xbf16>, vector<8x64xf32> -> vector<8x64xf32>
      %c0_33 = arith.constant 0 : index
      %c0_34 = arith.constant 0 : index
      %64 = vector.load %arg16[%c0_33, %c0_34] : memref<1x64xf32, #tpu.memory_space<vmem>>, vector<1x64xf32>
      %65 = vector.broadcast %64 : vector<1x64xf32> to vector<8x64xf32>
      %66 = arith.addf %63, %65 : vector<8x64xf32>
      %cst_35 = arith.constant 0.000000e+00 : f32
      %67 = vector.broadcast %cst_35 : f32 to vector<8x64xf32>
      %68 = arith.maximumf %66, %67 : vector<8x64xf32>
      %69 = arith.truncf %68 : vector<8x64xf32> to vector<8x64xbf16>
      %c0_36 = arith.constant 0 : index
      %c0_37 = arith.constant 0 : index
      %70 = vector.load %arg17[%c0_36, %c0_37] : memref<64x32xbf16, #tpu.memory_space<vmem>>, vector<64x32xbf16>
      %cst_38 = arith.constant dense<0.000000e+00> : vector<8x32xf32>
      %71 = tpu.matmul %69, %70, %cst_38 {dimension_numbers = #tpu.dot_dimension_numbers<[1], [0], [0], [1], [0, 0, 1, 1], [], []>} : vector<8x64xbf16>, vector<64x32xbf16>, vector<8x32xf32> -> vector<8x32xf32>
      %c0_39 = arith.constant 0 : index
      %c0_40 = arith.constant 0 : index
      %72 = vector.load %arg18[%c0_39, %c0_40] : memref<1x32xf32, #tpu.memory_space<vmem>>, vector<1x32xf32>
      %73 = vector.broadcast %72 : vector<1x32xf32> to vector<8x32xf32>
      %74 = arith.addf %71, %73 : vector<8x32xf32>
      %75 = arith.addf %60, %74 : vector<8x32xf32>
      %c0_41 = arith.constant 0 : index
      %c0_42 = arith.constant 0 : index
      %76 = vector.load %arg19[%c0_41, %c0_42] : memref<1x32xf32, #tpu.memory_space<vmem>>, vector<1x32xf32>
      %c0_43 = arith.constant 0 : index
      %c0_44 = arith.constant 0 : index
      %77 = vector.load %arg20[%c0_43, %c0_44] : memref<1x32xf32, #tpu.memory_space<vmem>>, vector<1x32xf32>
      %cst_45 = arith.constant dense<0.000000e+00> : vector<8xf32>
      %78 = vector.multi_reduction <add>, %75, %cst_45 [1] : vector<8x32xf32> to vector<8xf32>
      %79 = vector.shape_cast %78 : vector<8xf32> to vector<8x1xf32>
      %cst_46 = arith.constant 3.200000e+01 : f32
      %80 = vector.broadcast %cst_46 : f32 to vector<8x1xf32>
      %81 = arith.divf %79, %80 : vector<8x1xf32>
      %82 = vector.broadcast %81 : vector<8x1xf32> to vector<8x32xf32>
      %83 = arith.subf %75, %82 : vector<8x32xf32>
      %84 = vector.broadcast %81 : vector<8x1xf32> to vector<8x32xf32>
      %85 = arith.subf %75, %84 : vector<8x32xf32>
      %86 = arith.mulf %83, %85 : vector<8x32xf32>
      %cst_47 = arith.constant dense<0.000000e+00> : vector<8xf32>
      %87 = vector.multi_reduction <add>, %86, %cst_47 [1] : vector<8x32xf32> to vector<8xf32>
      %88 = vector.shape_cast %87 : vector<8xf32> to vector<8x1xf32>
      %cst_48 = arith.constant 3.200000e+01 : f32
      %89 = vector.broadcast %cst_48 : f32 to vector<8x1xf32>
      %90 = arith.divf %88, %89 : vector<8x1xf32>
      %91 = vector.broadcast %81 : vector<8x1xf32> to vector<8x32xf32>
      %92 = arith.subf %75, %91 : vector<8x32xf32>
      %cst_49 = arith.constant 9.99999974E-6 : f32
      %93 = vector.broadcast %cst_49 : f32 to vector<8x1xf32>
      %94 = arith.addf %90, %93 : vector<8x1xf32>
      %95 = math.rsqrt %94 : vector<8x1xf32>
      %96 = vector.broadcast %95 : vector<8x1xf32> to vector<8x32xf32>
      %97 = arith.mulf %92, %96 : vector<8x32xf32>
      %98 = vector.broadcast %76 : vector<1x32xf32> to vector<8x32xf32>
      %99 = arith.mulf %97, %98 : vector<8x32xf32>
      %100 = vector.broadcast %77 : vector<1x32xf32> to vector<8x32xf32>
      %101 = arith.addf %99, %100 : vector<8x32xf32>
      %c0_50 = arith.constant 0 : index
      %c0_51 = arith.constant 0 : index
      %c0_52 = arith.constant 0 : index
      %102 = vector.load %arg21[%c0_50, %c0_51, %c0_52] : memref<1x8x32xf32, #tpu.memory_space<vmem>>, vector<1x8x32xf32>
      %103 = vector.shape_cast %102 : vector<1x8x32xf32> to vector<8x32xf32>
      %104 = vector.shape_cast %101 : vector<8x32xf32> to vector<1x8x32xf32>
      tpu.vector_store %arg21[%c0_50, %c0_51, %c0_52], %104 {strides = array<i32>} : memref<1x8x32xf32, #tpu.memory_space<vmem>>, vector<1x8x32xf32>,
    } else {
    }
    return
  }
  func.func @transform_0(%arg0: i32, %arg1: i32, %arg2: i32) -> (i32, i32, i32) {
    %c0_i32 = arith.constant 0 : i32
    %c0_i32_0 = arith.constant 0 : i32
    return %arg0, %arg1, %c0_i32 : i32, i32, i32
  }
  func.func @transform_1(%arg0: i32, %arg1: i32, %arg2: i32) -> (i32, i32, i32) {
    %c0_i32 = arith.constant 0 : i32
    %c0_i32_0 = arith.constant 0 : i32
    return %arg0, %arg2, %c0_i32 : i32, i32, i32
  }
  func.func @transform_2(%arg0: i32, %arg1: i32, %arg2: i32) -> (i32, i32, i32) {
    %c0_i32 = arith.constant 0 : i32
    %c0_i32_0 = arith.constant 0 : i32
    %c0_i32_1 = arith.constant 0 : i32
    %c0_i32_2 = arith.constant 0 : i32
    return %c0_i32, %c0_i32_0, %c0_i32_1 : i32, i32, i32
  }
  func.func @transform_3(%arg0: i32, %arg1: i32, %arg2: i32) -> (i32, i32, i32) {
    %c0_i32 = arith.constant 0 : i32
    %c0_i32_0 = arith.constant 0 : i32
    %c0_i32_1 = arith.constant 0 : i32
    %c0_i32_2 = arith.constant 0 : i32
    return %c0_i32, %c0_i32_0, %c0_i32_1 : i32, i32, i32
  }
  func.func @transform_4(%arg0: i32, %arg1: i32, %arg2: i32) -> (i32, i32, i32) {
    %c0_i32 = arith.constant 0 : i32
    %c0_i32_0 = arith.constant 0 : i32
    %c0_i32_1 = arith.constant 0 : i32
    %c0_i32_2 = arith.constant 0 : i32
    return %c0_i32, %c0_i32_0, %c0_i32_1 : i32, i32, i32
  }
  func.func @transform_5(%arg0: i32, %arg1: i32, %arg2: i32) -> (i32, i32, i32) {
    %c0_i32 = arith.constant 0 : i32
    %c0_i32_0 = arith.constant 0 : i32
    %c0_i32_1 = arith.constant 0 : i32
    %c0_i32_2 = arith.constant 0 : i32
    return %c0_i32, %c0_i32_0, %c0_i32_1 : i32, i32, i32
  }
  func.func @transform_6(%arg0: i32, %arg1: i32, %arg2: i32) -> (i32, i32, i32) {
    %c0_i32 = arith.constant 0 : i32
    %c0_i32_0 = arith.constant 0 : i32
    %c0_i32_1 = arith.constant 0 : i32
    %c0_i32_2 = arith.constant 0 : i32
    return %c0_i32, %c0_i32_0, %c0_i32_1 : i32, i32, i32
  }
  func.func @transform_7(%arg0: i32, %arg1: i32, %arg2: i32) -> (i32, i32, i32) {
    %c0_i32 = arith.constant 0 : i32
    %c0_i32_0 = arith.constant 0 : i32
    %c0_i32_1 = arith.constant 0 : i32
    %c0_i32_2 = arith.constant 0 : i32
    return %c0_i32, %c0_i32_0, %c0_i32_1 : i32, i32, i32
  }
  func.func @transform_8(%arg0: i32, %arg1: i32, %arg2: i32) -> (i32, i32, i32) {
    %c0_i32 = arith.constant 0 : i32
    %c0_i32_0 = arith.constant 0 : i32
    %c0_i32_1 = arith.constant 0 : i32
    %c0_i32_2 = arith.constant 0 : i32
    return %c0_i32, %c0_i32_0, %c0_i32_1 : i32, i32, i32
  }
  func.func @transform_9(%arg0: i32, %arg1: i32, %arg2: i32) -> (i32, i32) {
    %c0_i32 = arith.constant 0 : i32
    %c0_i32_0 = arith.constant 0 : i32
    %c0_i32_1 = arith.constant 0 : i32
    return %c0_i32, %c0_i32_0 : i32, i32
  }
  func.func @transform_10(%arg0: i32, %arg1: i32, %arg2: i32) -> (i32, i32) {
    %c0_i32 = arith.constant 0 : i32
    %c0_i32_0 = arith.constant 0 : i32
    %c0_i32_1 = arith.constant 0 : i32
    return %c0_i32, %c0_i32_0 : i32, i32
  }
  func.func @transform_11(%arg0: i32, %arg1: i32, %arg2: i32) -> (i32, i32) {
    %c0_i32 = arith.constant 0 : i32
    %c0_i32_0 = arith.constant 0 : i32
    %c0_i32_1 = arith.constant 0 : i32
    return %c0_i32, %c0_i32_0 : i32, i32
  }
  func.func @transform_12(%arg0: i32, %arg1: i32, %arg2: i32) -> (i32, i32) {
    %c0_i32 = arith.constant 0 : i32
    %c0_i32_0 = arith.constant 0 : i32
    %c0_i32_1 = arith.constant 0 : i32
    return %c0_i32, %c0_i32_0 : i32, i32
  }
  func.func @transform_13(%arg0: i32, %arg1: i32, %arg2: i32) -> (i32, i32) {
    %c0_i32 = arith.constant 0 : i32
    %c0_i32_0 = arith.constant 0 : i32
    %c0_i32_1 = arith.constant 0 : i32
    return %c0_i32, %c0_i32_0 : i32, i32
  }
  func.func @transform_14(%arg0: i32, %arg1: i32, %arg2: i32) -> (i32, i32) {
    %c0_i32 = arith.constant 0 : i32
    %c0_i32_0 = arith.constant 0 : i32
    %c0_i32_1 = arith.constant 0 : i32
    return %c0_i32, %c0_i32_0 : i32, i32
  }
  func.func @transform_15(%arg0: i32, %arg1: i32, %arg2: i32) -> (i32, i32) {
    %c0_i32 = arith.constant 0 : i32
    %c0_i32_0 = arith.constant 0 : i32
    %c0_i32_1 = arith.constant 0 : i32
    return %c0_i32, %c0_i32_0 : i32, i32
  }
  func.func @transform_16(%arg0: i32, %arg1: i32, %arg2: i32) -> (i32, i32) {
    %c0_i32 = arith.constant 0 : i32
    %c0_i32_0 = arith.constant 0 : i32
    %c0_i32_1 = arith.constant 0 : i32
    return %c0_i32, %c0_i32_0 : i32, i32
  }
  func.func @transform_17(%arg0: i32, %arg1: i32, %arg2: i32) -> (i32, i32) {
    %c0_i32 = arith.constant 0 : i32
    %c0_i32_0 = arith.constant 0 : i32
    %c0_i32_1 = arith.constant 0 : i32
    return %c0_i32, %c0_i32_0 : i32, i32
  }
  func.func @transform_18(%arg0: i32, %arg1: i32, %arg2: i32) -> (i32, i32, i32) {
    %c0_i32 = arith.constant 0 : i32
    %c0_i32_0 = arith.constant 0 : i32
    return %arg0, %arg1, %c0_i32 : i32, i32, i32
  }
}

</mosaic_0001>

<llo_original>
// kernel: tpu_custom_call.1
$region0: #{tpu_custom_call.1}
  #allocation0 [shape = 'u32[]', space=smem, size = 0x4, offset = 0x4, fixed_abs, tag = 'smem constant byte address 0x4 - core index']
  #allocation1 [shape = 'u32[144,128]{1,0:T(1,128)}', space=vmem, size = 0x12000, scoped, tag = 'internal scratch']
  #allocation2 [shape = 'bf16[2,8,16]{2,1,0:T(8,128)(2,1)}', space=vmem, size = 0x1000, scoped, tag = 'scratch operand']
  #allocation3 [shape = 'bf16[2,8,16]{2,1,0:T(8,128)(2,1)}', space=vmem, size = 0x1000, scoped, tag = 'scratch operand']
  #allocation4 [shape = 'bf16[2,8,16]{2,1,0:T(8,128)(2,1)}', space=vmem, size = 0x1000, scoped, tag = 'scratch operand']
  #allocation5 [shape = 'f32[2,8,16]{2,1,0:T(8,128)}', space=vmem, size = 0x2000, scoped, tag = 'scratch operand']
  #allocation6 [shape = 'f32[2,8,1]{2,1,0:T(8,128)}', space=vmem, size = 0x2000, scoped, tag = 'scratch operand']
  #allocation7 [shape = 'f32[2,8,1]{2,1,0:T(8,128)}', space=vmem, size = 0x2000, scoped, tag = 'scratch operand']
  %s0 = inlined_call_operand.vmem [shape: f32[2,8,32], index: 0, kind: input, shape index: {}]
  %s1 = inlined_call_operand.vmem [shape: f32[2,8,32], index: 1, kind: input, shape index: {}]
  %s2 = inlined_call_operand.vmem [shape: bf16[2,32,16], index: 2, kind: input, shape index: {}]
  %s3 = inlined_call_operand.vmem [shape: bf16[2,32,16], index: 3, kind: input, shape index: {}]
  %s4 = inlined_call_operand.vmem [shape: bf16[2,32,16], index: 4, kind: input, shape index: {}]
  %s5 = inlined_call_operand.vmem [shape: f32[2,1,16], index: 5, kind: input, shape index: {}]
  %s6 = inlined_call_operand.vmem [shape: f32[2,1,16], index: 6, kind: input, shape index: {}]
  %s7 = inlined_call_operand.vmem [shape: f32[2,1,16], index: 7, kind: input, shape index: {}]
  %s8 = inlined_call_operand.vmem [shape: bf16[2,16,32], index: 8, kind: input, shape index: {}]
  %s9 = inlined_call_operand.vmem [shape: f32[1,32], index: 9, kind: input, shape index: {}]
  %s10 = inlined_call_operand.vmem [shape: f32[1,32], index: 10, kind: input, shape index: {}]
  %s11 = inlined_call_operand.vmem [shape: f32[1,32], index: 11, kind: input, shape index: {}]
  %s12 = inlined_call_operand.vmem [shape: bf16[32,64], index: 12, kind: input, shape index: {}]
  %s13 = inlined_call_operand.vmem [shape: f32[1,64], index: 13, kind: input, shape index: {}]
  %s14 = inlined_call_operand.vmem [shape: bf16[64,32], index: 14, kind: input, shape index: {}]
  %s15 = inlined_call_operand.vmem [shape: f32[1,32], index: 15, kind: input, shape index: {}]
  %s16 = inlined_call_operand.vmem [shape: f32[1,32], index: 16, kind: input, shape index: {}]
  %s17 = inlined_call_operand.vmem [shape: f32[1,32], index: 17, kind: input, shape index: {}]
  %s18 = inlined_call_operand.hbm [shape: f32[2,8,32], index: 18, kind: output, shape index: {}]
  %s19 = sld [smem:[#allocation0]]
  $region117: #{tpu_custom_call.1} parent=0
    _
  %s21 = ssub.s32 1, %s19
  %s22 = scalar_select 0, %s21, %s19
  $region1: #{tpu_custom_call.1} parent=0
    #allocation8 [shape = 'u8[8192]{0}', space=vmem, size = 0x2000, scoped, tag = 'output window, operand 0']
    #allocation9 [shape = 's32[2]{0}', space=sflag, size = 0x8, scoped, tag = 'scoped memory for tpu_custom_call.1']
    %23 = vsyncpa [#allocation9], 0
    %s24 = scalar_lea.sflag [#allocation9], 1
    %25 = vsyncpa %s24, 0
    loop: start=0, step=1, limit=4
    $region2: #{tpu_custom_call.1} parent=1 // loop_pre_header
      _
    $region3: #{tpu_custom_call.1} parent=1 // loop_header
      %s27 = sphi 0, %s31
      %p28 = scmp.ge.s32.totalorder %s27, 4
      %s34 = sphi 0, %s53
      %s35 = sphi 0, %s49
      %s36 = sphi 0, %s45
      %s37 = sphi 0, %s34
      %s38 = sphi 0, %s35
      %s39 = sphi 0, %s36
      %s40 = sphi 0, %s37
      %s41 = sphi 0, %s38
      %s42 = sphi 0, %s39
      %s58 = sphi 0, %s60
      %s61 = sphi 0, %s58
      %s62 = sphi 0, %s61
      %s78 = sphi 0, %s62
      %s86 = sphi 0, %s88
      %s89 = sphi 0, %s86
      %s90 = sphi 0, %s89
      %s106 = sphi 0, %s90
      %s110 = sphi 0, %s110
      %s112 = sphi 0, %s110
      %s113 = sphi 0, %s112
      %s127 = sphi 0, %s113
      %s131 = sphi 0, %s131
      %s133 = sphi 0, %s131
      %s134 = sphi 0, %s133
      %s148 = sphi 0, %s134
      %s152 = sphi 0, %s152
      %s154 = sphi 0, %s152
      %s155 = sphi 0, %s154
      %s169 = sphi 0, %s155
      %s173 = sphi 0, %s173
      %s175 = sphi 0, %s173
      %s176 = sphi 0, %s175
      %s190 = sphi 0, %s176
      %s194 = sphi 0, %s194
      %s196 = sphi 0, %s194
      %s197 = sphi 0, %s196
      %s211 = sphi 0, %s197
      %s215 = sphi 0, %s215
      %s217 = sphi 0, %s215
      %s218 = sphi 0, %s217
      %s232 = sphi 0, %s218
      %s236 = sphi 0, %s236
      %s238 = sphi 0, %s236
      %s239 = sphi 0, %s238
      %s253 = sphi 0, %s239
      %s257 = sphi 0, %s257
      %s259 = sphi 0, %s257
      %s260 = sphi 0, %s259
      %s274 = sphi 0, %s260
      %s278 = sphi 0, %s278
      %s280 = sphi 0, %s278
      %s281 = sphi 0, %s280
      %s295 = sphi 0, %s281
      %s299 = sphi 0, %s299
      %s301 = sphi 0, %s299
      %s302 = sphi 0, %s301
      %s316 = sphi 0, %s302
      %s320 = sphi 0, %s320
      %s322 = sphi 0, %s320
      %s323 = sphi 0, %s322
      %s337 = sphi 0, %s323
      %s341 = sphi 0, %s341
      %s343 = sphi 0, %s341
      %s344 = sphi 0, %s343
      %s358 = sphi 0, %s344
      %s362 = sphi 0, %s362
      %s364 = sphi 0, %s362
      %s365 = sphi 0, %s364
      %s379 = sphi 0, %s365
      %s383 = sphi 0, %s383
      %s385 = sphi 0, %s383
      %s386 = sphi 0, %s385
      %s400 = sphi 0, %s386
      %s404 = sphi 0, %s404
      %s406 = sphi 0, %s404
      %s407 = sphi 0, %s406
      %s421 = sphi 0, %s407
      %s425 = sphi 0, %s425
      %s427 = sphi 0, %s425
      %s428 = sphi 0, %s427
      %s442 = sphi 0, %s428
      %s450 = sphi 0, %s452
      %s453 = sphi 0, %s450
      %s454 = sphi 0, %s453
      %s470 = sphi 0, %s454
    $region4: #{tpu_custom_call.1} parent=1 // loop_header_branch
      %30 = sbr.rel (%p28) target = $region8
    $region5: #{tpu_custom_call.1} parent=1 // loop_body
      %s32 = ssub.s32 %s27, 1
      %s33 = ssub.s32 %s27, 2
      %s43 = sadd.s32 1, %s36
      %p44 = scmp.ge.s32.totalorder %s43, 1
      %s45 = scalar_select %p44, 0, %s43
      %s46 = sadd.s32 1, %s35
      %s47 = scalar_select %p44, %s46, %s35
      %p48 = scmp.ge.s32.totalorder %s47, 1
      %s49 = scalar_select %p48, 0, %s47
      %s50 = sadd.s32 1, %s34
      %s51 = scalar_select %p48, %s50, %s34
      %p52 = scmp.ge.s32.totalorder %s51, 2
      %s53 = scalar_select %p52, 0, %s51
      %s54 = ssub.s32 %s34, %s53
      %s55 = ssub.s32 %s35, %s49
      %s56 = sor.u32 %s54, %s55
      %p57 = scmp.eq.s32.totalorder %s56, 0
      %s59 = sadd.s32 %s58, 1
      %s60 = scalar_select %p57, %s58, %s59
      %p63 = pneg %p57
      %p64 = scmp.eq.s32.totalorder %s27, 1
      %p65 = por %p63, %p64
      %p66 = scmp.ne.s32.totalorder %s58, %s61
      %p67 = scmp.eq.s32.totalorder %s27, 0
      %p68 = por %p66, %p67
      %p69 = scmp.ne.s32.totalorder %s58, %s61
      %p70 = scmp.eq.s32.totalorder %s32, 1
      %p71 = por %p69, %p70
      %p72 = scmp.ne.s32.totalorder %s61, %s62
      %p73 = scmp.eq.s32.totalorder %s32, 0
      %p74 = por %p72, %p73
      %p75 = scmp.ne.s32.totalorder %s61, %s62
      %p76 = scmp.eq.s32.totalorder %s33, 1
      %p77 = por %p75, %p76
      %p79 = scmp.ne.s32.totalorder %s62, %s78
      %p80 = scmp.eq.s32.totalorder %s33, 0
      %p81 = por %p79, %p80
      %s82 = ssub.s32 %s34, %s53
      %s83 = ssub.s32 %s36, %s45
      %s84 = sor.u32 %s82, %s83
      %p85 = scmp.eq.s32.totalorder %s84, 0
      %s87 = sadd.s32 %s86, 1
      %s88 = scalar_select %p85, %s86, %s87
      %p91 = pneg %p85
      %p92 = scmp.eq.s32.totalorder %s27, 1
      %p93 = por %p91, %p92
      %p94 = scmp.ne.s32.totalorder %s86, %s89
      %p95 = scmp.eq.s32.totalorder %s27, 0
      %p96 = por %p94, %p95
      %p97 = scmp.ne.s32.totalorder %s86, %s89
      %p98 = scmp.eq.s32.totalorder %s32, 1
      %p99 = por %p97, %p98
      %p100 = scmp.ne.s32.totalorder %s89, %s90
      %p101 = scmp.eq.s32.totalorder %s32, 0
      %p102 = por %p100, %p101
      %p103 = scmp.ne.s32.totalorder %s89, %s90
      %p104 = scmp.eq.s32.totalorder %s33, 1
      %p105 = por %p103, %p104
      %p107 = scmp.ne.s32.totalorder %s90, %s106
      %p108 = scmp.eq.s32.totalorder %s33, 0
      %p109 = por %p107, %p108
      %s111 = sadd.s32 %s110, 1
      %p114 = scmp.eq.s32.totalorder %s27, 1
      %p115 = scmp.ne.s32.totalorder %s110, %s112
      %p116 = scmp.eq.s32.totalorder %s27, 0
      %p117 = por %p115, %p116
      %p118 = scmp.ne.s32.totalorder %s110, %s112
      %p119 = scmp.eq.s32.totalorder %s32, 1
      %p120 = por %p118, %p119
      %p121 = scmp.ne.s32.totalorder %s112, %s113
      %p122 = scmp.eq.s32.totalorder %s32, 0
      %p123 = por %p121, %p122
      %p124 = scmp.ne.s32.totalorder %s112, %s113
      %p125 = scmp.eq.s32.totalorder %s33, 1
      %p126 = por %p124, %p125
      %p128 = scmp.ne.s32.totalorder %s113, %s127
      %p129 = scmp.eq.s32.totalorder %s33, 0
      %p130 = por %p128, %p129
      %s132 = sadd.s32 %s131, 1
      %p135 = scmp.eq.s32.totalorder %s27, 1
      %p136 = scmp.ne.s32.totalorder %s131, %s133
      %p137 = scmp.eq.s32.totalorder %s27, 0
      %p138 = por %p136, %p137
      %p139 = scmp.ne.s32.totalorder %s131, %s133
      %p140 = scmp.eq.s32.totalorder %s32, 1
      %p141 = por %p139, %p140
      %p142 = scmp.ne.s32.totalorder %s133, %s134
      %p143 = scmp.eq.s32.totalorder %s32, 0
      %p144 = por %p142, %p143
      %p145 = scmp.ne.s32.totalorder %s133, %s134
      %p146 = scmp.eq.s32.totalorder %s33, 1
      %p147 = por %p145, %p146
      %p149 = scmp.ne.s32.totalorder %s134, %s148
      %p150 = scmp.eq.s32.totalorder %s33, 0
      %p151 = por %p149, %p150
      %s153 = sadd.s32 %s152, 1
      %p156 = scmp.eq.s32.totalorder %s27, 1
      %p157 = scmp.ne.s32.totalorder %s152, %s154
      %p158 = scmp.eq.s32.totalorder %s27, 0
      %p159 = por %p157, %p158
      %p160 = scmp.ne.s32.totalorder %s152, %s154
      %p161 = scmp.eq.s32.totalorder %s32, 1
      %p162 = por %p160, %p161
      %p163 = scmp.ne.s32.totalorder %s154, %s155
      %p164 = scmp.eq.s32.totalorder %s32, 0
      %p165 = por %p163, %p164
      %p166 = scmp.ne.s32.totalorder %s154, %s155
      %p167 = scmp.eq.s32.totalorder %s33, 1
      %p168 = por %p166, %p167
      %p170 = scmp.ne.s32.totalorder %s155, %s169
      %p171 = scmp.eq.s32.totalorder %s33, 0
      %p172 = por %p170, %p171
      %s174 = sadd.s32 %s173, 1
      %p177 = scmp.eq.s32.totalorder %s27, 1
      %p178 = scmp.ne.s32.totalorder %s173, %s175
      %p179 = scmp.eq.s32.totalorder %s27, 0
      %p180 = por %p178, %p179
      %p181 = scmp.ne.s32.totalorder %s173, %s175
      %p182 = scmp.eq.s32.totalorder %s32, 1
      %p183 = por %p181, %p182
      %p184 = scmp.ne.s32.totalorder %s175, %s176
      %p185 = scmp.eq.s32.totalorder %s32, 0
      %p186 = por %p184, %p185
      %p187 = scmp.ne.s32.totalorder %s175, %s176
      %p188 = scmp.eq.s32.totalorder %s33, 1
      %p189 = por %p187, %p188
      %p191 = scmp.ne.s32.totalorder %s176, %s190
      %p192 = scmp.eq.s32.totalorder %s33, 0
      %p193 = por %p191, %p192
      %s195 = sadd.s32 %s194, 1
      %p198 = scmp.eq.s32.totalorder %s27, 1
      %p199 = scmp.ne.s32.totalorder %s194, %s196
      %p200 = scmp.eq.s32.totalorder %s27, 0
      %p201 = por %p199, %p200
      %p202 = scmp.ne.s32.totalorder %s194, %s196
      %p203 = scmp.eq.s32.totalorder %s32, 1
      %p204 = por %p202, %p203
      %p205 = scmp.ne.s32.totalorder %s196, %s197
      %p206 = scmp.eq.s32.totalorder %s32, 0
      %p207 = por %p205, %p206
      %p208 = scmp.ne.s32.totalorder %s196, %s197
      %p209 = scmp.eq.s32.totalorder %s33, 1
      %p210 = por %p208, %p209
      %p212 = scmp.ne.s32.totalorder %s197, %s211
      %p213 = scmp.eq.s32.totalorder %s33, 0
      %p214 = por %p212, %p213
      %s216 = sadd.s32 %s215, 1
      %p219 = scmp.eq.s32.totalorder %s27, 1
      %p220 = scmp.ne.s32.totalorder %s215, %s217
      %p221 = scmp.eq.s32.totalorder %s27, 0
      %p222 = por %p220, %p221
      %p223 = scmp.ne.s32.totalorder %s215, %s217
      %p224 = scmp.eq.s32.totalorder %s32, 1
      %p225 = por %p223, %p224
      %p226 = scmp.ne.s32.totalorder %s217, %s218
      %p227 = scmp.eq.s32.totalorder %s32, 0
      %p228 = por %p226, %p227
      %p229 = scmp.ne.s32.totalorder %s217, %s218
      %p230 = scmp.eq.s32.totalorder %s33, 1
      %p231 = por %p229, %p230
      %p233 = scmp.ne.s32.totalorder %s218, %s232
      %p234 = scmp.eq.s32.totalorder %s33, 0
      %p235 = por %p233, %p234
      %s237 = sadd.s32 %s236, 1
      %p240 = scmp.eq.s32.totalorder %s27, 1
      %p241 = scmp.ne.s32.totalorder %s236, %s238
      %p242 = scmp.eq.s32.totalorder %s27, 0
      %p243 = por %p241, %p242
      %p244 = scmp.ne.s32.totalorder %s236, %s238
      %p245 = scmp.eq.s32.totalorder %s32, 1
      %p246 = por %p244, %p245
      %p247 = scmp.ne.s32.totalorder %s238, %s239
      %p248 = scmp.eq.s32.totalorder %s32, 0
      %p249 = por %p247, %p248
      %p250 = scmp.ne.s32.totalorder %s238, %s239
      %p251 = scmp.eq.s32.totalorder %s33, 1
      %p252 = por %p250, %p251
      %p254 = scmp.ne.s32.totalorder %s239, %s253
      %p255 = scmp.eq.s32.totalorder %s33, 0
      %p256 = por %p254, %p255
      %s258 = sadd.s32 %s257, 1
      %p261 = scmp.eq.s32.totalorder %s27, 1
      %p262 = scmp.ne.s32.totalorder %s257, %s259
      %p263 = scmp.eq.s32.totalorder %s27, 0
      %p264 = por %p262, %p263
      %p265 = scmp.ne.s32.totalorder %s257, %s259
      %p266 = scmp.eq.s32.totalorder %s32, 1
      %p267 = por %p265, %p266
      %p268 = scmp.ne.s32.totalorder %s259, %s260
      %p269 = scmp.eq.s32.totalorder %s32, 0
      %p270 = por %p268, %p269
      %p271 = scmp.ne.s32.totalorder %s259, %s260
      %p272 = scmp.eq.s32.totalorder %s33, 1
      %p273 = por %p271, %p272
      %p275 = scmp.ne.s32.totalorder %s260, %s274
      %p276 = scmp.eq.s32.totalorder %s33, 0
      %p277 = por %p275, %p276
      %s279 = sadd.s32 %s278, 1
      %p282 = scmp.eq.s32.totalorder %s27, 1
      %p283 = scmp.ne.s32.totalorder %s278, %s280
      %p284 = scmp.eq.s32.totalorder %s27, 0
      %p285 = por %p283, %p284
      %p286 = scmp.ne.s32.totalorder %s278, %s280
      %p287 = scmp.eq.s32.totalorder %s32, 1
      %p288 = por %p286, %p287
      %p289 = scmp.ne.s32.totalorder %s280, %s281
      %p290 = scmp.eq.s32.totalorder %s32, 0
      %p291 = por %p289, %p290
      %p292 = scmp.ne.s32.totalorder %s280, %s281
      %p293 = scmp.eq.s32.totalorder %s33, 1
      %p294 = por %p292, %p293
      %p296 = scmp.ne.s32.totalorder %s281, %s295
      %p297 = scmp.eq.s32.totalorder %s33, 0
      %p298 = por %p296, %p297
      %s300 = sadd.s32 %s299, 1
      %p303 = scmp.eq.s32.totalorder %s27, 1
      %p304 = scmp.ne.s32.totalorder %s299, %s301
      %p305 = scmp.eq.s32.totalorder %s27, 0
      %p306 = por %p304, %p305
      %p307 = scmp.ne.s32.totalorder %s299, %s301
      %p308 = scmp.eq.s32.totalorder %s32, 1
      %p309 = por %p307, %p308
      %p310 = scmp.ne.s32.totalorder %s301, %s302
      %p311 = scmp.eq.s32.totalorder %s32, 0
      %p312 = por %p310, %p311
      %p313 = scmp.ne.s32.totalorder %s301, %s302
      %p314 = scmp.eq.s32.totalorder %s33, 1
      %p315 = por %p313, %p314
      %p317 = scmp.ne.s32.totalorder %s302, %s316
      %p318 = scmp.eq.s32.totalorder %s33, 0
      %p319 = por %p317, %p318
      %s321 = sadd.s32 %s320, 1
      %p324 = scmp.eq.s32.totalorder %s27, 1
      %p325 = scmp.ne.s32.totalorder %s320, %s322
      %p326 = scmp.eq.s32.totalorder %s27, 0
      %p327 = por %p325, %p326
      %p328 = scmp.ne.s32.totalorder %s320, %s322
      %p329 = scmp.eq.s32.totalorder %s32, 1
      %p330 = por %p328, %p329
      %p331 = scmp.ne.s32.totalorder %s322, %s323
      %p332 = scmp.eq.s32.totalorder %s32, 0
      %p333 = por %p331, %p332
      %p334 = scmp.ne.s32.totalorder %s322, %s323
      %p335 = scmp.eq.s32.totalorder %s33, 1
      %p336 = por %p334, %p335
      %p338 = scmp.ne.s32.totalorder %s323, %s337
      %p339 = scmp.eq.s32.totalorder %s33, 0
      %p340 = por %p338, %p339
      %s342 = sadd.s32 %s341, 1
      %p345 = scmp.eq.s32.totalorder %s27, 1
      %p346 = scmp.ne.s32.totalorder %s341, %s343
      %p347 = scmp.eq.s32.totalorder %s27, 0
      %p348 = por %p346, %p347
      %p349 = scmp.ne.s32.totalorder %s341, %s343
      %p350 = scmp.eq.s32.totalorder %s32, 1
      %p351 = por %p349, %p350
      %p352 = scmp.ne.s32.totalorder %s343, %s344
      %p353 = scmp.eq.s32.totalorder %s32, 0
      %p354 = por %p352, %p353
      %p355 = scmp.ne.s32.totalorder %s343, %s344
      %p356 = scmp.eq.s32.totalorder %s33, 1
      %p357 = por %p355, %p356
      %p359 = scmp.ne.s32.totalorder %s344, %s358
      %p360 = scmp.eq.s32.totalorder %s33, 0
      %p361 = por %p359, %p360
      %s363 = sadd.s32 %s362, 1
      %p366 = scmp.eq.s32.totalorder %s27, 1
      %p367 = scmp.ne.s32.totalorder %s362, %s364
      %p368 = scmp.eq.s32.totalorder %s27, 0
      %p369 = por %p367, %p368
      %p370 = scmp.ne.s32.totalorder %s362, %s364
      %p371 = scmp.eq.s32.totalorder %s32, 1
      %p372 = por %p370, %p371
      %p373 = scmp.ne.s32.totalorder %s364, %s365
      %p374 = scmp.eq.s32.totalorder %s32, 0
      %p375 = por %p373, %p374
      %p376 = scmp.ne.s32.totalorder %s364, %s365
      %p377 = scmp.eq.s32.totalorder %s33, 1
      %p378 = por %p376, %p377
      %p380 = scmp.ne.s32.totalorder %s365, %s379
      %p381 = scmp.eq.s32.totalorder %s33, 0
      %p382 = por %p380, %p381
      %s384 = sadd.s32 %s383, 1
      %p387 = scmp.eq.s32.totalorder %s27, 1
      %p388 = scmp.ne.s32.totalorder %s383, %s385
      %p389 = scmp.eq.s32.totalorder %s27, 0
      %p390 = por %p388, %p389
      %p391 = scmp.ne.s32.totalorder %s383, %s385
      %p392 = scmp.eq.s32.totalorder %s32, 1
      %p393 = por %p391, %p392
      %p394 = scmp.ne.s32.totalorder %s385, %s386
      %p395 = scmp.eq.s32.totalorder %s32, 0
      %p396 = por %p394, %p395
      %p397 = scmp.ne.s32.totalorder %s385, %s386
      %p398 = scmp.eq.s32.totalorder %s33, 1
      %p399 = por %p397, %p398
      %p401 = scmp.ne.s32.totalorder %s386, %s400
      %p402 = scmp.eq.s32.totalorder %s33, 0
      %p403 = por %p401, %p402
      %s405 = sadd.s32 %s404, 1
      %p408 = scmp.eq.s32.totalorder %s27, 1
      %p409 = scmp.ne.s32.totalorder %s404, %s406
      %p410 = scmp.eq.s32.totalorder %s27, 0
      %p411 = por %p409, %p410
      %p412 = scmp.ne.s32.totalorder %s404, %s406
      %p413 = scmp.eq.s32.totalorder %s32, 1
      %p414 = por %p412, %p413
      %p415 = scmp.ne.s32.totalorder %s406, %s407
      %p416 = scmp.eq.s32.totalorder %s32, 0
      %p417 = por %p415, %p416
      %p418 = scmp.ne.s32.totalorder %s406, %s407
      %p419 = scmp.eq.s32.totalorder %s33, 1
      %p420 = por %p418, %p419
      %p422 = scmp.ne.s32.totalorder %s407, %s421
      %p423 = scmp.eq.s32.totalorder %s33, 0
      %p424 = por %p422, %p423
      %s426 = sadd.s32 %s425, 1
      %p429 = scmp.eq.s32.totalorder %s27, 1
      %p430 = scmp.ne.s32.totalorder %s425, %s427
      %p431 = scmp.eq.s32.totalorder %s27, 0
      %p432 = por %p430, %p431
      %p433 = scmp.ne.s32.totalorder %s425, %s427
      %p434 = scmp.eq.s32.totalorder %s32, 1
      %p435 = por %p433, %p434
      %p436 = scmp.ne.s32.totalorder %s427, %s428
      %p437 = scmp.eq.s32.totalorder %s32, 0
      %p438 = por %p436, %p437
      %p439 = scmp.ne.s32.totalorder %s427, %s428
      %p440 = scmp.eq.s32.totalorder %s33, 1
      %p441 = por %p439, %p440
      %p443 = scmp.ne.s32.totalorder %s428, %s442
      %p444 = scmp.eq.s32.totalorder %s33, 0
      %p445 = por %p443, %p444
      %s446 = ssub.s32 %s34, %s53
      %s447 = ssub.s32 %s35, %s49
      %s448 = sor.u32 %s446, %s447
      %p449 = scmp.eq.s32.totalorder %s448, 0
      %s451 = sadd.s32 %s450, 1
      %s452 = scalar_select %p449, %s450, %s451
      %p455 = pneg %p449
      %p456 = scmp.eq.s32.totalorder %s27, 1
      %p457 = por %p455, %p456
      %p458 = scmp.ne.s32.totalorder %s450, %s453
      %p459 = scmp.eq.s32.totalorder %s27, 0
      %p460 = por %p458, %p459
      %p461 = scmp.ne.s32.totalorder %s450, %s453
      %p462 = scmp.eq.s32.totalorder %s32, 1
      %p463 = por %p461, %p462
      %p464 = scmp.ne.s32.totalorder %s453, %s454
      %p465 = scmp.eq.s32.totalorder %s32, 0
      %p466 = por %p464, %p465
      %p467 = scmp.ne.s32.totalorder %s453, %s454
      %p468 = scmp.eq.s32.totalorder %s33, 1
      %p469 = por %p467, %p468
      %p471 = scmp.ne.s32.totalorder %s454, %s470
      %p472 = scmp.eq.s32.totalorder %s33, 0
      %p473 = por %p471, %p472
      %p474 = scmp.le.s32.totalorder 1, %s27
      %p475 = scmp.lt.s32.totalorder %s27, 3
      %p476 = pnand %p474, %p475
      %p477 = pneg %p476
      // Predicated region
      $region9: #{tpu_custom_call.1} parent=5 // pred_check
        _
      $region10: #{tpu_custom_call.1} parent=5 // pred_check_branch
        %479 = sbr.rel (%p476) target = $region12
      $region11: #{tpu_custom_call.1} parent=5 // pred_region
        %s480 = ssub.s32 %s27, 1
        // Predicated region
        $region13: #{tpu_custom_call.1} parent=11 // pred_check
          %p481 = pneg %p123
        $region14: #{tpu_custom_call.1} parent=11 // pred_check_branch
          %483 = sbr.rel (%p481) target = $region16
        $region15: #{tpu_custom_call.1} parent=11 // pred_region
          _
        $region16: #{tpu_custom_call.1} parent=11 // pred_fallthru
          _
        // Predicated region
        $region17: #{tpu_custom_call.1} parent=11 // pred_check
          %p484 = pneg %p144
        $region18: #{tpu_custom_call.1} parent=11 // pred_check_branch
          %486 = sbr.rel (%p484) target = $region20
        $region19: #{tpu_custom_call.1} parent=11 // pred_region
          _
        $region20: #{tpu_custom_call.1} parent=11 // pred_fallthru
          _
        // Predicated region
        $region21: #{tpu_custom_call.1} parent=11 // pred_check
          %p487 = pneg %p165
        $region22: #{tpu_custom_call.1} parent=11 // pred_check_branch
          %489 = sbr.rel (%p487) target = $region24
        $region23: #{tpu_custom_call.1} parent=11 // pred_region
          _
        $region24: #{tpu_custom_call.1} parent=11 // pred_fallthru
          _
        // Predicated region
        $region25: #{tpu_custom_call.1} parent=11 // pred_check
          %p490 = pneg %p186
        $region26: #{tpu_custom_call.1} parent=11 // pred_check_branch
          %492 = sbr.rel (%p490) target = $region28
        $region27: #{tpu_custom_call.1} parent=11 // pred_region
          _
        $region28: #{tpu_custom_call.1} parent=11 // pred_fallthru
          _
        // Predicated region
        $region29: #{tpu_custom_call.1} parent=11 // pred_check
          %p493 = pneg %p207
        $region30: #{tpu_custom_call.1} parent=11 // pred_check_branch
          %495 = sbr.rel (%p493) target = $region32
        $region31: #{tpu_custom_call.1} parent=11 // pred_region
          _
        $region32: #{tpu_custom_call.1} parent=11 // pred_fallthru
          _
        // Predicated region
        $region33: #{tpu_custom_call.1} parent=11 // pred_check
          %p496 = pneg %p228
        $region34: #{tpu_custom_call.1} parent=11 // pred_check_branch
          %498 = sbr.rel (%p496) target = $region36
        $region35: #{tpu_custom_call.1} parent=11 // pred_region
          _
        $region36: #{tpu_custom_call.1} parent=11 // pred_fallthru
          _
        // Predicated region
        $region37: #{tpu_custom_call.1} parent=11 // pred_check
          %p499 = pneg %p249
        $region38: #{tpu_custom_call.1} parent=11 // pred_check_branch
          %501 = sbr.rel (%p499) target = $region40
        $region39: #{tpu_custom_call.1} parent=11 // pred_region
          _
        $region40: #{tpu_custom_call.1} parent=11 // pred_fallthru
          _
        // Predicated region
        $region41: #{tpu_custom_call.1} parent=11 // pred_check
          %p502 = pneg %p270
        $region42: #{tpu_custom_call.1} parent=11 // pred_check_branch
          %504 = sbr.rel (%p502) target = $region44
        $region43: #{tpu_custom_call.1} parent=11 // pred_region
          _
        $region44: #{tpu_custom_call.1} parent=11 // pred_fallthru
          _
        // Predicated region
        $region45: #{tpu_custom_call.1} parent=11 // pred_check
          %p505 = pneg %p291
        $region46: #{tpu_custom_call.1} parent=11 // pred_check_branch
          %507 = sbr.rel (%p505) target = $region48
        $region47: #{tpu_custom_call.1} parent=11 // pred_region
          _
        $region48: #{tpu_custom_call.1} parent=11 // pred_fallthru
          _
        // Predicated region
        $region49: #{tpu_custom_call.1} parent=11 // pred_check
          %p508 = pneg %p312
        $region50: #{tpu_custom_call.1} parent=11 // pred_check_branch
          %510 = sbr.rel (%p508) target = $region52
        $region51: #{tpu_custom_call.1} parent=11 // pred_region
          _
        $region52: #{tpu_custom_call.1} parent=11 // pred_fallthru
          _
        // Predicated region
        $region53: #{tpu_custom_call.1} parent=11 // pred_check
          %p511 = pneg %p333
        $region54: #{tpu_custom_call.1} parent=11 // pred_check_branch
          %513 = sbr.rel (%p511) target = $region56
        $region55: #{tpu_custom_call.1} parent=11 // pred_region
          _
        $region56: #{tpu_custom_call.1} parent=11 // pred_fallthru
          _
        // Predicated region
        $region57: #{tpu_custom_call.1} parent=11 // pred_check
          %p514 = pneg %p354
        $region58: #{tpu_custom_call.1} parent=11 // pred_check_branch
          %516 = sbr.rel (%p514) target = $region60
        $region59: #{tpu_custom_call.1} parent=11 // pred_region
          _
        $region60: #{tpu_custom_call.1} parent=11 // pred_fallthru
          _
        // Predicated region
        $region61: #{tpu_custom_call.1} parent=11 // pred_check
          %p517 = pneg %p375
        $region62: #{tpu_custom_call.1} parent=11 // pred_check_branch
          %519 = sbr.rel (%p517) target = $region64
        $region63: #{tpu_custom_call.1} parent=11 // pred_region
          _
        $region64: #{tpu_custom_call.1} parent=11 // pred_fallthru
          _
        // Predicated region
        $region65: #{tpu_custom_call.1} parent=11 // pred_check
          %p520 = pneg %p396
        $region66: #{tpu_custom_call.1} parent=11 // pred_check_branch
          %522 = sbr.rel (%p520) target = $region68
        $region67: #{tpu_custom_call.1} parent=11 // pred_region
          _
        $region68: #{tpu_custom_call.1} parent=11 // pred_fallthru
          _
        // Predicated region
        $region69: #{tpu_custom_call.1} parent=11 // pred_check
          %p523 = pneg %p417
        $region70: #{tpu_custom_call.1} parent=11 // pred_check_branch
          %525 = sbr.rel (%p523) target = $region72
        $region71: #{tpu_custom_call.1} parent=11 // pred_region
          _
        $region72: #{tpu_custom_call.1} parent=11 // pred_fallthru
          _
        // Predicated region
        $region73: #{tpu_custom_call.1} parent=11 // pred_check
          %p526 = pneg %p438
        $region74: #{tpu_custom_call.1} parent=11 // pred_check_branch
          %528 = sbr.rel (%p526) target = $region76
        $region75: #{tpu_custom_call.1} parent=11 // pred_region
          _
        $region76: #{tpu_custom_call.1} parent=11 // pred_fallthru
          _
      $region12: #{tpu_custom_call.1} parent=5 // pred_fallthru
        _
      %p529 = scmp.lt.s32.totalorder %s27, 2
      // Predicated region
      $region77: #{tpu_custom_call.1} parent=5 // pred_check
        %p530 = pneg %p529
      $region78: #{tpu_custom_call.1} parent=5 // pred_check_branch
        %532 = sbr.rel (%p530) target = $region80
      $region79: #{tpu_custom_call.1} parent=5 // pred_region
        // Predicated region
        $region81: #{tpu_custom_call.1} parent=79 // pred_check
          %p533 = pneg %p68
        $region82: #{tpu_custom_call.1} parent=79 // pred_check_branch
          %535 = sbr.rel (%p533) target = $region84
        $region83: #{tpu_custom_call.1} parent=79 // pred_region
          %p536 = scmp.lt.s32.totalorder %s34, 1
          %s537 = scalar_select %p536, %s34, 1
          %p538 = scmp.lt.s32.totalorder %s35, 0
          %s539 = scalar_select %p538, %s35, 0
          %s540 = sadd.s32 %s539, %s537
          %s541 = smul.addr %s540, 8
          %s542 = scalar_lea.vmem %s0, %s541
        $region84: #{tpu_custom_call.1} parent=79 // pred_fallthru
          _
        // Predicated region
        $region85: #{tpu_custom_call.1} parent=79 // pred_check
          %p543 = pneg %p96
        $region86: #{tpu_custom_call.1} parent=79 // pred_check_branch
          %545 = sbr.rel (%p543) target = $region88
        $region87: #{tpu_custom_call.1} parent=79 // pred_region
          %p546 = scmp.lt.s32.totalorder %s34, 1
          %s547 = scalar_select %p546, %s34, 1
          %p548 = scmp.lt.s32.totalorder %s36, 0
          %s549 = scalar_select %p548, %s36, 0
          %s550 = sadd.s32 %s549, %s547
          %s551 = smul.addr %s550, 8
          %s552 = scalar_lea.vmem %s1, %s551
        $region88: #{tpu_custom_call.1} parent=79 // pred_fallthru
          _
      $region80: #{tpu_custom_call.1} parent=5 // pred_fallthru
        _
      %p553 = scmp.le.s32.totalorder 1, %s27
      %p554 = scmp.lt.s32.totalorder %s27, 3
      %p555 = pnand %p553, %p554
      %p556 = pneg %p555
      // Predicated region
      $region89: #{tpu_custom_call.1} parent=5 // pred_check
        _
      $region90: #{tpu_custom_call.1} parent=5 // pred_check_branch
        %558 = sbr.rel (%p555) target = $region92
      $region91: #{tpu_custom_call.1} parent=5 // pred_region
        %s559 = ssub.s32 %s27, 1
        %p560 = scmp.lt.s32.totalorder %s37, 1
        %s561 = scalar_select %p560, %s37, 1
        %p562 = scmp.lt.s32.totalorder %s38, 0
        %s563 = scalar_select %p562, %s38, 0
        %s564 = sadd.s32 %s563, %s561
        %s565 = smul.addr %s564, 8
        %s566 = scalar_lea.vmem %s0, %s565
        %p567 = pneg %p74
        %p568 = pneg %p71
        %p569 = scmp.lt.s32.totalorder %s37, 1
        %s570 = scalar_select %p569, %s37, 1
        %p571 = scmp.lt.s32.totalorder %s39, 0
        %s572 = scalar_select %p571, %s39, 0
        %s573 = sadd.s32 %s572, %s570
        %s574 = smul.addr %s573, 8
        %s575 = scalar_lea.vmem %s1, %s574
        %p576 = pneg %p102
        %p577 = pneg %p99
        %p578 = pneg %p123
        %p579 = pneg %p120
        %p580 = pneg %p144
        %p581 = pneg %p141
        %p582 = pneg %p165
        %p583 = pneg %p162
        %p584 = pneg %p186
        %p585 = pneg %p183
        %p586 = pneg %p207
        %p587 = pneg %p204
        %p588 = pneg %p228
        %p589 = pneg %p225
        %p590 = pneg %p249
        %p591 = pneg %p246
        %p592 = pneg %p270
        %p593 = pneg %p267
        %p594 = pneg %p291
        %p595 = pneg %p288
        %p596 = pneg %p312
        %p597 = pneg %p309
        %p598 = pneg %p333
        %p599 = pneg %p330
        %p600 = pneg %p354
        %p601 = pneg %p351
        %p602 = pneg %p375
        %p603 = pneg %p372
        %p604 = pneg %p396
        %p605 = pneg %p393
        %p606 = pneg %p417
        %p607 = pneg %p414
        %p608 = pneg %p438
        %p609 = pneg %p435
        %p610 = pneg %p466
        %p611 = pneg %p463
        %s612 = sand.u32 %s453, 1
        %s613 = scalar_lea.sflag [#allocation9], %s612
        %s614 = sand.u32 %s453, 1
        %s615 = smul.addr %s614, 8
        %s616 = scalar_lea.vmem [#allocation8], %s615
        %p617 = scmp.lt.s32.totalorder %s37, 1
        %s618 = scalar_select %p617, %s37, 1
        %p619 = scmp.lt.s32.totalorder %s38, 0
        %s620 = scalar_select %p619, %s38, 0
        %s621 = sadd.s32 %s620, %s618
        %s622 = smul.addr %s621, 8
        %s623 = scalar_lea.vmem %s0, %s622
        %p624 = scmp.lt.s32.totalorder %s37, 1
        %s625 = scalar_select %p624, %s37, 1
        %p626 = scmp.lt.s32.totalorder %s39, 0
        %s627 = scalar_select %p626, %s39, 0
        %s628 = sadd.s32 %s627, %s625
        %s629 = smul.addr %s628, 8
        %s630 = scalar_lea.vmem %s1, %s629
        %s632 = smul.u32 %s38, 8
        %s633 = smul.u32 %s39, 8
        %p634 = scmp.eq.s32.totalorder %s39, 0
        // Predicated region
        $region93: #{tpu_custom_call.1} parent=91 // pred_check
          %p635 = pneg %p634
        $region94: #{tpu_custom_call.1} parent=91 // pred_check_branch
          %637 = sbr.rel (%p635) target = $region96
        $region95: #{tpu_custom_call.1} parent=91 // pred_region
          %v638 = vld [vmem:[%s623] sm:$0xff]
          %v639 = vpack.c.bf16 %v638, %v638
          %v640 = vld [vmem:[%s2] sm:$0xf]
          %v641 = vld [vmem:[%s2 + $0x4] sm:$0xf]
          %v642 = vld [vmem:[%s2 + $0x8] sm:$0xf]
          %v643 = vld [vmem:[%s2 + $0xc] sm:$0xf]
          %v644 = vld [vmem:[%s5] sm:$0x1]
          %v646 = vlaneseq
          %v647 = vshrl.u32 %v646, 7
          %v648 = vsub.s32 0, %v647
          %v649 = vrot.slane %v644, %v648
          %v655 = vunpack.c.l.b16 %v640
          %v656 = vunpack.c.l.b16 %v641
          %v657 = vunpack.c.l.b16 %v642
          %v658 = vunpack.c.l.b16 %v643
          %v659 = vpack.c.b16 %v656, %v655
          %v660 = vpack.c.b16 %v658, %v657
          %vm663 = vcmask 261120
          %v665 = vsel %vm663, %v639, 0
          %667 = vmatprep.subr.bf16.mxu0 0
          %668 = vmatpush1.bf16.msra.mxu0 %v659
          %669 = vmatprep.subr.bf16.mxu0 0
          %670 = vmatpush1.bf16.msra.mxu0 %v660
          %671 = vmatprep.subr.bf16.mxu0 0
          %672 = vmatpush1.bf16.msra.mxu0 0
          %673 = vmatprep.subr.bf16.mxu0 0
          %674 = vmatpush1.bf16.msra.mxu0 0
          %675 = vmatprep.subr.bf16.mxu0 0
          %676 = vmatpush1.bf16.msra.mxu0 0
          %677 = vmatprep.subr.bf16.mxu0 0
          %678 = vmatpush1.bf16.msra.mxu0 0
          %679 = vmatprep.subr.bf16.mxu0 0
          %680 = vmatpush1.bf16.msra.mxu0 0
          %681 = vmatprep.subr.bf16.mxu0 0
          %682 = vmatpush1.bf16.msra.mxu0 0
          %683 = vmatprep.subr.bf16.mxu0 0
          %684 = vmatpush1.bf16.msra.mxu0 0
          %685 = vmatprep.subr.bf16.mxu0 0
          %686 = vmatpush1.bf16.msra.mxu0 0
          %687 = vmatprep.subr.bf16.mxu0 0
          %688 = vmatpush1.bf16.msra.mxu0 0
          %689 = vmatprep.subr.bf16.mxu0 0
          %690 = vmatpush1.bf16.msra.mxu0 0
          %691 = vmatprep.subr.bf16.mxu0 0
          %692 = vmatpush1.bf16.msra.mxu0 0
          %693 = vmatprep.subr.bf16.mxu0 0
          %694 = vmatpush1.bf16.msra.mxu0 0
          %695 = vmatprep.subr.bf16.mxu0 0
          %696 = vmatpush1.bf16.msra.mxu0 0
          %697 = vmatprep.subr.bf16.mxu0 0
          %698 = vmatpush1.bf16.msra.mxu0 0
          %699 = vmatprep.mubr.bf16.mxu0 0
          %700 = vmatmul.mubr.bf16.gmra.mrb[0].mxu0 %v665
          %v701 = vpop.f32.mrb[0].mxu0
          %v702 = vadd.f32 %v649, %v701
          %v703 = vpop.f32.mrb[0].mxu0
          %v704 = vpop.f32.mrb[0].mxu0
          %v705 = vpop.f32.mrb[0].mxu0
          %706 = vdwg.mxu0
          %v707 = vpack.c.bf16 %v702, %v702
          %vm708 = vcmask 125952
          %709 = vst.msk [vmem:[#allocation2] sm:$0xf] %vm708, %v707
          %s710 = scalar_lea.vmem %s2, 16
          %v711 = vld [vmem:[%s710] sm:$0xf]
          %v712 = vld [vmem:[%s710 + $0x4] sm:$0xf]
          %v713 = vld [vmem:[%s710 + $0x8] sm:$0xf]
          %v714 = vld [vmem:[%s710 + $0xc] sm:$0xf]
          %s715 = scalar_lea.vmem %s5, 1
          %v716 = vld [vmem:[%s715] sm:$0x1]
          %v718 = vlaneseq
          %v719 = vshrl.u32 %v718, 7
          %v720 = vsub.s32 0, %v719
          %v721 = vrot.slane %v716, %v720
          %v727 = vunpack.c.l.b16 %v711
          %v728 = vunpack.c.l.b16 %v712
          %v729 = vunpack.c.l.b16 %v713
          %v730 = vunpack.c.l.b16 %v714
          %v731 = vpack.c.b16 %v728, %v727
          %v732 = vpack.c.b16 %v730, %v729
          %735 = vmatprep.subr.bf16.mxu0 0
          %736 = vmatpush1.bf16.msra.mxu0 %v731
          %737 = vmatprep.subr.bf16.mxu0 0
          %738 = vmatpush1.bf16.msra.mxu0 %v732
          %739 = vmatprep.subr.bf16.mxu0 0
          %740 = vmatpush1.bf16.msra.mxu0 0
          %741 = vmatprep.subr.bf16.mxu0 0
          %742 = vmatpush1.bf16.msra.mxu0 0
          %743 = vmatprep.subr.bf16.mxu0 0
          %744 = vmatpush1.bf16.msra.mxu0 0
          %745 = vmatprep.subr.bf16.mxu0 0
          %746 = vmatpush1.bf16.msra.mxu0 0
          %747 = vmatprep.subr.bf16.mxu0 0
          %748 = vmatpush1.bf16.msra.mxu0 0
          %749 = vmatprep.subr.bf16.mxu0 0
          %750 = vmatpush1.bf16.msra.mxu0 0
          %751 = vmatprep.subr.bf16.mxu0 0
          %752 = vmatpush1.bf16.msra.mxu0 0
          %753 = vmatprep.subr.bf16.mxu0 0
          %754 = vmatpush1.bf16.msra.mxu0 0
          %755 = vmatprep.subr.bf16.mxu0 0
          %756 = vmatpush1.bf16.msra.mxu0 0
          %757 = vmatprep.subr.bf16.mxu0 0
          %758 = vmatpush1.bf16.msra.mxu0 0
          %759 = vmatprep.subr.bf16.mxu0 0
          %760 = vmatpush1.bf16.msra.mxu0 0
          %761 = vmatprep.subr.bf16.mxu0 0
          %762 = vmatpush1.bf16.msra.mxu0 0
          %763 = vmatprep.subr.bf16.mxu0 0
          %764 = vmatpush1.bf16.msra.mxu0 0
          %765 = vmatprep.subr.bf16.mxu0 0
          %766 = vmatpush1.bf16.msra.mxu0 0
          %767 = vmatprep.mubr.bf16.mxu0 0
          %768 = vmatmul.mubr.bf16.gmra.mrb[0].mxu0 %v665
          %v769 = vpop.f32.mrb[0].mxu0
          %v770 = vadd.f32 %v721, %v769
          %v771 = vpop.f32.mrb[0].mxu0
          %v772 = vpop.f32.mrb[0].mxu0
          %v773 = vpop.f32.mrb[0].mxu0
          %774 = vdwg.mxu0
          %v775 = vpack.c.bf16 %v770, %v770
          %s776 = scalar_lea.vmem [#allocation2], 4
          %777 = vst.msk [vmem:[%s776] sm:$0xf] %vm708, %v775
          %vm778 = vcmask 7168
          %779 = vst.msk [vmem:[#allocation6] sm:$0xff] %vm778, -inf
          %780 = vst.msk [vmem:[#allocation6 + $0x8] sm:$0xff] %vm778, -inf
          %781 = vst.msk [vmem:[#allocation7] sm:$0xff] %vm778, 0.0
          %782 = vst.msk [vmem:[#allocation7 + $0x8] sm:$0xff] %vm778, 0.0
          %vm783 = vcmask 130048
          %784 = vst.msk [vmem:[#allocation5] sm:$0xff] %vm783, 0.0
          %785 = vst.msk [vmem:[#allocation5 + $0x8] sm:$0xff] %vm783, 0.0
        $region96: #{tpu_custom_call.1} parent=91 // pred_fallthru
          _
        %s786 = sadd.s32 %s632, 7
        %p787 = scmp.le.s32.totalorder %s633, %s786
        // Predicated region
        $region97: #{tpu_custom_call.1} parent=91 // pred_check
          %p788 = pneg %p787
        $region98: #{tpu_custom_call.1} parent=91 // pred_check_branch
          %790 = sbr.rel (%p788) target = $region100
        $region99: #{tpu_custom_call.1} parent=91 // pred_region
          %v791 = vld [vmem:[%s630] sm:$0xff]
          %v792 = vpack.c.bf16 %v791, %v791
          %v793 = vld [vmem:[%s3] sm:$0xf]
          %v794 = vld [vmem:[%s3 + $0x4] sm:$0xf]
          %v795 = vld [vmem:[%s3 + $0x8] sm:$0xf]
          %v796 = vld [vmem:[%s3 + $0xc] sm:$0xf]
          %v797 = vld [vmem:[%s6] sm:$0x1]
          %v799 = vlaneseq
          %v800 = vshrl.u32 %v799, 7
          %v801 = vsub.s32 0, %v800
          %v802 = vrot.slane %v797, %v801
          %v808 = vunpack.c.l.b16 %v793
          %v809 = vunpack.c.l.b16 %v794
          %v810 = vunpack.c.l.b16 %v795
          %v811 = vunpack.c.l.b16 %v796
          %v812 = vpack.c.b16 %v809, %v808
          %v813 = vpack.c.b16 %v811, %v810
          %vm816 = vcmask 261120
          %v818 = vsel %vm816, %v792, 0
          %820 = vmatprep.subr.bf16.mxu0 0
          %821 = vmatpush1.bf16.msra.mxu0 %v812
          %822 = vmatprep.subr.bf16.mxu0 0
          %823 = vmatpush1.bf16.msra.mxu0 %v813
          %824 = vmatprep.subr.bf16.mxu0 0
          %825 = vmatpush1.bf16.msra.mxu0 0
          %826 = vmatprep.subr.bf16.mxu0 0
          %827 = vmatpush1.bf16.msra.mxu0 0
          %828 = vmatprep.subr.bf16.mxu0 0
          %829 = vmatpush1.bf16.msra.mxu0 0
          %830 = vmatprep.subr.bf16.mxu0 0
          %831 = vmatpush1.bf16.msra.mxu0 0
          %832 = vmatprep.subr.bf16.mxu0 0
          %833 = vmatpush1.bf16.msra.mxu0 0
          %834 = vmatprep.subr.bf16.mxu0 0
          %835 = vmatpush1.bf16.msra.mxu0 0
          %836 = vmatprep.subr.bf16.mxu0 0
          %837 = vmatpush1.bf16.msra.mxu0 0
          %838 = vmatprep.subr.bf16.mxu0 0
          %839 = vmatpush1.bf16.msra.mxu0 0
          %840 = vmatprep.subr.bf16.mxu0 0
          %841 = vmatpush1.bf16.msra.mxu0 0
          %842 = vmatprep.subr.bf16.mxu0 0
          %843 = vmatpush1.bf16.msra.mxu0 0
          %844 = vmatprep.subr.bf16.mxu0 0
          %845 = vmatpush1.bf16.msra.mxu0 0
          %846 = vmatprep.subr.bf16.mxu0 0
          %847 = vmatpush1.bf16.msra.mxu0 0
          %848 = vmatprep.subr.bf16.mxu0 0
          %849 = vmatpush1.bf16.msra.mxu0 0
          %850 = vmatprep.subr.bf16.mxu0 0
          %851 = vmatpush1.bf16.msra.mxu0 0
          %852 = vmatprep.mubr.bf16.mxu0 0
          %853 = vmatmul.mubr.bf16.gmra.mrb[0].mxu0 %v818
          %v854 = vpop.f32.mrb[0].mxu0
          %v855 = vadd.f32 %v802, %v854
          %v856 = vpop.f32.mrb[0].mxu0
          %v857 = vpop.f32.mrb[0].mxu0
          %v858 = vpop.f32.mrb[0].mxu0
          %859 = vdwg.mxu0
          %v860 = vld [vmem:[%s4] sm:$0xf]
          %v861 = vld [vmem:[%s4 + $0x4] sm:$0xf]
          %v862 = vld [vmem:[%s4 + $0x8] sm:$0xf]
          %v863 = vld [vmem:[%s4 + $0xc] sm:$0xf]
          %v864 = vld [vmem:[%s7] sm:$0x1]
          %v866 = vlaneseq
          %v867 = vshrl.u32 %v866, 7
          %v868 = vsub.s32 0, %v867
          %v869 = vrot.slane %v864, %v868
          %v875 = vunpack.c.l.b16 %v860
          %v876 = vunpack.c.l.b16 %v861
          %v877 = vunpack.c.l.b16 %v862
          %v878 = vunpack.c.l.b16 %v863
          %v879 = vpack.c.b16 %v876, %v875
          %v880 = vpack.c.b16 %v878, %v877
          %883 = vmatprep.subr.bf16.mxu0 0
          %884 = vmatpush1.bf16.msra.mxu0 %v879
          %885 = vmatprep.subr.bf16.mxu0 0
          %886 = vmatpush1.bf16.msra.mxu0 %v880
          %887 = vmatprep.subr.bf16.mxu0 0
          %888 = vmatpush1.bf16.msra.mxu0 0
          %889 = vmatprep.subr.bf16.mxu0 0
          %890 = vmatpush1.bf16.msra.mxu0 0
          %891 = vmatprep.subr.bf16.mxu0 0
          %892 = vmatpush1.bf16.msra.mxu0 0
          %893 = vmatprep.subr.bf16.mxu0 0
          %894 = vmatpush1.bf16.msra.mxu0 0
          %895 = vmatprep.subr.bf16.mxu0 0
          %896 = vmatpush1.bf16.msra.mxu0 0
          %897 = vmatprep.subr.bf16.mxu0 0
          %898 = vmatpush1.bf16.msra.mxu0 0
          %899 = vmatprep.subr.bf16.mxu0 0
          %900 = vmatpush1.bf16.msra.mxu0 0
          %901 = vmatprep.subr.bf16.mxu0 0
          %902 = vmatpush1.bf16.msra.mxu0 0
          %903 = vmatprep.subr.bf16.mxu0 0
          %904 = vmatpush1.bf16.msra.mxu0 0
          %905 = vmatprep.subr.bf16.mxu0 0
          %906 = vmatpush1.bf16.msra.mxu0 0
          %907 = vmatprep.subr.bf16.mxu0 0
          %908 = vmatpush1.bf16.msra.mxu0 0
          %909 = vmatprep.subr.bf16.mxu0 0
          %910 = vmatpush1.bf16.msra.mxu0 0
          %911 = vmatprep.subr.bf16.mxu0 0
          %912 = vmatpush1.bf16.msra.mxu0 0
          %913 = vmatprep.subr.bf16.mxu0 0
          %914 = vmatpush1.bf16.msra.mxu0 0
          %915 = vmatprep.mubr.bf16.mxu0 0
          %916 = vmatmul.mubr.bf16.gmra.mrb[0].mxu0 %v818
          %v917 = vpop.f32.mrb[0].mxu0
          %v918 = vadd.f32 %v869, %v917
          %v919 = vpop.f32.mrb[0].mxu0
          %v920 = vpop.f32.mrb[0].mxu0
          %v921 = vpop.f32.mrb[0].mxu0
          %922 = vdwg.mxu0
          %v923 = vpack.c.bf16 %v855, %v855
          %vm924 = vcmask 125952
          %925 = vst.msk [vmem:[#allocation3] sm:$0xf] %vm924, %v923
          %v926 = vpack.c.bf16 %v918, %v918
          %927 = vst.msk [vmem:[#allocation4] sm:$0xf] %vm924, %v926
          %s928 = scalar_lea.vmem %s3, 16
          %v929 = vld [vmem:[%s928] sm:$0xf]
          %v930 = vld [vmem:[%s928 + $0x4] sm:$0xf]
          %v931 = vld [vmem:[%s928 + $0x8] sm:$0xf]
          %v932 = vld [vmem:[%s928 + $0xc] sm:$0xf]
          %s933 = scalar_lea.vmem %s6, 1
          %v934 = vld [vmem:[%s933] sm:$0x1]
          %v936 = vlaneseq
          %v937 = vshrl.u32 %v936, 7
          %v938 = vsub.s32 0, %v937
          %v939 = vrot.slane %v934, %v938
          %v945 = vunpack.c.l.b16 %v929
          %v946 = vunpack.c.l.b16 %v930
          %v947 = vunpack.c.l.b16 %v931
          %v948 = vunpack.c.l.b16 %v932
          %v949 = vpack.c.b16 %v946, %v945
          %v950 = vpack.c.b16 %v948, %v947
          %953 = vmatprep.subr.bf16.mxu0 0
          %954 = vmatpush1.bf16.msra.mxu0 %v949
          %955 = vmatprep.subr.bf16.mxu0 0
          %956 = vmatpush1.bf16.msra.mxu0 %v950
          %957 = vmatprep.subr.bf16.mxu0 0
          %958 = vmatpush1.bf16.msra.mxu0 0
          %959 = vmatprep.subr.bf16.mxu0 0
          %960 = vmatpush1.bf16.msra.mxu0 0
          %961 = vmatprep.subr.bf16.mxu0 0
          %962 = vmatpush1.bf16.msra.mxu0 0
          %963 = vmatprep.subr.bf16.mxu0 0
          %964 = vmatpush1.bf16.msra.mxu0 0
          %965 = vmatprep.subr.bf16.mxu0 0
          %966 = vmatpush1.bf16.msra.mxu0 0
          %967 = vmatprep.subr.bf16.mxu0 0
          %968 = vmatpush1.bf16.msra.mxu0 0
          %969 = vmatprep.subr.bf16.mxu0 0
          %970 = vmatpush1.bf16.msra.mxu0 0
          %971 = vmatprep.subr.bf16.mxu0 0
          %972 = vmatpush1.bf16.msra.mxu0 0
          %973 = vmatprep.subr.bf16.mxu0 0
          %974 = vmatpush1.bf16.msra.mxu0 0
          %975 = vmatprep.subr.bf16.mxu0 0
          %976 = vmatpush1.bf16.msra.mxu0 0
          %977 = vmatprep.subr.bf16.mxu0 0
          %978 = vmatpush1.bf16.msra.mxu0 0
          %979 = vmatprep.subr.bf16.mxu0 0
          %980 = vmatpush1.bf16.msra.mxu0 0
          %981 = vmatprep.subr.bf16.mxu0 0
          %982 = vmatpush1.bf16.msra.mxu0 0
          %983 = vmatprep.subr.bf16.mxu0 0
          %984 = vmatpush1.bf16.msra.mxu0 0
          %985 = vmatprep.mubr.bf16.mxu0 0
          %986 = vmatmul.mubr.bf16.gmra.mrb[0].mxu0 %v818
          %v987 = vpop.f32.mrb[0].mxu0
          %v988 = vadd.f32 %v939, %v987
          %v989 = vpop.f32.mrb[0].mxu0
          %v990 = vpop.f32.mrb[0].mxu0
          %v991 = vpop.f32.mrb[0].mxu0
          %992 = vdwg.mxu0
          %s993 = scalar_lea.vmem %s4, 16
          %v994 = vld [vmem:[%s993] sm:$0xf]
          %v995 = vld [vmem:[%s993 + $0x4] sm:$0xf]
          %v996 = vld [vmem:[%s993 + $0x8] sm:$0xf]
          %v997 = vld [vmem:[%s993 + $0xc] sm:$0xf]
          %s998 = scalar_lea.vmem %s7, 1
          %v999 = vld [vmem:[%s998] sm:$0x1]
          %v1001 = vlaneseq
          %v1002 = vshrl.u32 %v1001, 7
          %v1003 = vsub.s32 0, %v1002
          %v1004 = vrot.slane %v999, %v1003
          %v1010 = vunpack.c.l.b16 %v994
          %v1011 = vunpack.c.l.b16 %v995
          %v1012 = vunpack.c.l.b16 %v996
          %v1013 = vunpack.c.l.b16 %v997
          %v1014 = vpack.c.b16 %v1011, %v1010
          %v1015 = vpack.c.b16 %v1013, %v1012
          %1018 = vmatprep.subr.bf16.mxu0 0
          %1019 = vmatpush1.bf16.msra.mxu0 %v1014
          %1020 = vmatprep.subr.bf16.mxu0 0
          %1021 = vmatpush1.bf16.msra.mxu0 %v1015
          %1022 = vmatprep.subr.bf16.mxu0 0
          %1023 = vmatpush1.bf16.msra.mxu0 0
          %1024 = vmatprep.subr.bf16.mxu0 0
          %1025 = vmatpush1.bf16.msra.mxu0 0
          %1026 = vmatprep.subr.bf16.mxu0 0
          %1027 = vmatpush1.bf16.msra.mxu0 0
          %1028 = vmatprep.subr.bf16.mxu0 0
          %1029 = vmatpush1.bf16.msra.mxu0 0
          %1030 = vmatprep.subr.bf16.mxu0 0
          %1031 = vmatpush1.bf16.msra.mxu0 0
          %1032 = vmatprep.subr.bf16.mxu0 0
          %1033 = vmatpush1.bf16.msra.mxu0 0
          %1034 = vmatprep.subr.bf16.mxu0 0
          %1035 = vmatpush1.bf16.msra.mxu0 0
          %1036 = vmatprep.subr.bf16.mxu0 0
          %1037 = vmatpush1.bf16.msra.mxu0 0
          %1038 = vmatprep.subr.bf16.mxu0 0
          %1039 = vmatpush1.bf16.msra.mxu0 0
          %1040 = vmatprep.subr.bf16.mxu0 0
          %1041 = vmatpush1.bf16.msra.mxu0 0
          %1042 = vmatprep.subr.bf16.mxu0 0
          %1043 = vmatpush1.bf16.msra.mxu0 0
          %1044 = vmatprep.subr.bf16.mxu0 0
          %1045 = vmatpush1.bf16.msra.mxu0 0
          %1046 = vmatprep.subr.bf16.mxu0 0
          %1047 = vmatpush1.bf16.msra.mxu0 0
          %1048 = vmatprep.subr.bf16.mxu0 0
          %1049 = vmatpush1.bf16.msra.mxu0 0
          %1050 = vmatprep.mubr.bf16.mxu0 0
          %1051 = vmatmul.mubr.bf16.gmra.mrb[0].mxu0 %v818
          %v1052 = vpop.f32.mrb[0].mxu0
          %v1053 = vadd.f32 %v1004, %v1052
          %v1054 = vpop.f32.mrb[0].mxu0
          %v1055 = vpop.f32.mrb[0].mxu0
          %v1056 = vpop.f32.mrb[0].mxu0
          %1057 = vdwg.mxu0
          %v1058 = vpack.c.bf16 %v988, %v988
          %s1059 = scalar_lea.vmem [#allocation3], 4
          %1060 = vst.msk [vmem:[%s1059] sm:$0xf] %vm924, %v1058
          %v1061 = vpack.c.bf16 %v1053, %v1053
          %s1062 = scalar_lea.vmem [#allocation4], 4
          %1063 = vst.msk [vmem:[%s1062] sm:$0xf] %vm924, %v1061
          %v1064 = vld [vmem:[#allocation2] sm:$0xf]
          %v1065 = vld [vmem:[#allocation2 + $0x4] sm:$0xf]
          %v1066 = vld [vmem:[#allocation3] sm:$0xf]
          %v1067 = vld [vmem:[#allocation3 + $0x4] sm:$0xf]
          %vm1068 = vcmask 130048
          %v1070 = vsel %vm1068, %v1064, 0
          %v1073 = vsel %vm1068, %v1066, 0
          %1075 = vmatprep.subr.bf16.mxu0 0
          %1076 = vmatpush1.bf16.xpose.msra.mxu0 %v1073
          %1077 = vmatprep.subr.bf16.mxu0 0
          %1078 = vmatpush1.bf16.xpose.msra.mxu0 0
          %1079 = vmatprep.subr.bf16.mxu0 0
          %1080 = vmatpush1.bf16.xpose.msra.mxu0 0
          %1081 = vmatprep.subr.bf16.mxu0 0
          %1082 = vmatpush1.bf16.xpose.msra.mxu0 0
          %1083 = vmatprep.subr.bf16.mxu0 0
          %1084 = vmatpush1.bf16.xpose.msra.mxu0 0
          %1085 = vmatprep.subr.bf16.mxu0 0
          %1086 = vmatpush1.bf16.xpose.msra.mxu0 0
          %1087 = vmatprep.subr.bf16.mxu0 0
          %1088 = vmatpush1.bf16.xpose.msra.mxu0 0
          %1089 = vmatprep.subr.bf16.mxu0 0
          %1090 = vmatpush1.bf16.xpose.msra.mxu0 0
          %1091 = vmatprep.subr.bf16.mxu0 0
          %1092 = vmatpush1.bf16.xpose.msra.mxu0 0
          %1093 = vmatprep.subr.bf16.mxu0 0
          %1094 = vmatpush1.bf16.xpose.msra.mxu0 0
          %1095 = vmatprep.subr.bf16.mxu0 0
          %1096 = vmatpush1.bf16.xpose.msra.mxu0 0
          %1097 = vmatprep.subr.bf16.mxu0 0
          %1098 = vmatpush1.bf16.xpose.msra.mxu0 0
          %1099 = vmatprep.subr.bf16.mxu0 0
          %1100 = vmatpush1.bf16.xpose.msra.mxu0 0
          %1101 = vmatprep.subr.bf16.mxu0 0
          %1102 = vmatpush1.bf16.xpose.msra.mxu0 0
          %1103 = vmatprep.subr.bf16.mxu0 0
          %1104 = vmatpush1.bf16.xpose.msra.mxu0 0
          %1105 = vmatprep.subr.bf16.mxu0 0
          %1106 = vmatpush1.bf16.xpose.msra.mxu0 0
          %1107 = vmatprep.mubr.bf16.mxu0 0
          %1108 = vmatmul.mubr.bf16.gmra.mrb[0].mxu0 %v1070
          %v1109 = vpop.f32.mrb[0].mxu0
          %v1110 = vadd.f32 0.0, %v1109
          %v1111 = vpop.f32.mrb[0].mxu0
          %v1112 = vpop.f32.mrb[0].mxu0
          %v1113 = vpop.f32.mrb[0].mxu0
          %1114 = vdwg.mxu0
          %v1116 = vsel %vm1068, %v1065, 0
          %v1119 = vsel %vm1068, %v1067, 0
          %1121 = vmatprep.subr.bf16.mxu0 0
          %1122 = vmatpush1.bf16.xpose.msra.mxu0 %v1119
          %1123 = vmatprep.subr.bf16.mxu0 0
          %1124 = vmatpush1.bf16.xpose.msra.mxu0 0
          %1125 = vmatprep.subr.bf16.mxu0 0
          %1126 = vmatpush1.bf16.xpose.msra.mxu0 0
          %1127 = vmatprep.subr.bf16.mxu0 0
          %1128 = vmatpush1.bf16.xpose.msra.mxu0 0
          %1129 = vmatprep.subr.bf16.mxu0 0
          %1130 = vmatpush1.bf16.xpose.msra.mxu0 0
          %1131 = vmatprep.subr.bf16.mxu0 0
          %1132 = vmatpush1.bf16.xpose.msra.mxu0 0
          %1133 = vmatprep.subr.bf16.mxu0 0
          %1134 = vmatpush1.bf16.xpose.msra.mxu0 0
          %1135 = vmatprep.subr.bf16.mxu0 0
          %1136 = vmatpush1.bf16.xpose.msra.mxu0 0
          %1137 = vmatprep.subr.bf16.mxu0 0
          %1138 = vmatpush1.bf16.xpose.msra.mxu0 0
          %1139 = vmatprep.subr.bf16.mxu0 0
          %1140 = vmatpush1.bf16.xpose.msra.mxu0 0
          %1141 = vmatprep.subr.bf16.mxu0 0
          %1142 = vmatpush1.bf16.xpose.msra.mxu0 0
          %1143 = vmatprep.subr.bf16.mxu0 0
          %1144 = vmatpush1.bf16.xpose.msra.mxu0 0
          %1145 = vmatprep.subr.bf16.mxu0 0
          %1146 = vmatpush1.bf16.xpose.msra.mxu0 0
          %1147 = vmatprep.subr.bf16.mxu0 0
          %1148 = vmatpush1.bf16.xpose.msra.mxu0 0
          %1149 = vmatprep.subr.bf16.mxu0 0
          %1150 = vmatpush1.bf16.xpose.msra.mxu0 0
          %1151 = vmatprep.subr.bf16.mxu0 0
          %1152 = vmatpush1.bf16.xpose.msra.mxu0 0
          %1153 = vmatprep.mubr.bf16.mxu0 0
          %1154 = vmatmul.mubr.bf16.gmra.mrb[0].mxu0 %v1116
          %v1155 = vpop.f32.mrb[0].mxu0
          %v1156 = vadd.f32 0.0, %v1155
          %v1157 = vpop.f32.mrb[0].mxu0
          %v1158 = vpop.f32.mrb[0].mxu0
          %v1159 = vpop.f32.mrb[0].mxu0
          %1160 = vdwg.mxu0
          %v1161 = vmul.f32 %v1110, 0.25
          %v1162 = vmul.f32 %v1156, 0.25
          %v1163 = vlaneseq
          %v1164 = vshrl.u32 %v1163, 7
          %v1165 = vstv %s632
          %v1166 = vadd.s32 %v1165, %v1164
          %v1167 = vlaneseq
          %v1168 = vand.u32 %v1167, 127
          %v1169 = vstv %s633
          %v1170 = vadd.s32 %v1169, %v1168
          %vm1171 = vcmp.le.s32.totalorder %v1170, %v1166
          %v1172 = vsel %vm1171, 0.0, -1e+30
          %v1173 = vadd.f32 %v1161, %v1172
          %v1174 = vadd.f32 %v1162, %v1172
          %v1175 = vld [vmem:[#allocation6] sm:$0xff]
          %v1176 = vld [vmem:[#allocation6 + $0x8] sm:$0xff]
          %vm1177 = vcmask 64512
          %v1178 = vsel %vm1177, %v1173, -inf
          %1179 = vmax.xlane.f32.xlu0 %v1178
          %v1180 = vpop.xlane.xlu0 %1179
          %v1181 = vsel %vm1177, %v1174, -inf
          %1182 = vmax.xlane.f32.xlu0 %v1181
          %v1183 = vpop.xlane.xlu0 %1182
          %v1184 = vmax.f32 %v1175, %v1180
          %v1185 = vmax.f32 %v1176, %v1183
          %v1186 = vsub.f32 %v1175, %v1184
          %v1187 = vsub.f32 %v1176, %v1185
          %v1188 = vmul.f32 %v1186, 1.442695
          %v1189 = vpow.pop %v1188
          %v1190 = vmul.f32 %v1187, 1.442695
          %v1191 = vpow.pop %v1190
          %1193 = vset.pattern.permute.xlu0 0
          %1194 = vperm.xlu0 %1193, %v1184
          %v1195 = vpop.permute.xlu0 %1194
          %1198 = vset.pattern.permute.xlu0 0
          %1199 = vperm.xlu0 %1198, %v1185
          %v1200 = vpop.permute.xlu0 %1199
          %v1202 = vsub.f32 %v1173, %v1195
          %v1203 = vsub.f32 %v1174, %v1200
          %v1204 = vmul.f32 %v1202, 1.442695
          %v1205 = vpow.pop %v1204
          %v1206 = vmul.f32 %v1203, 1.442695
          %v1207 = vpow.pop %v1206
          %v1208 = vld [vmem:[#allocation7] sm:$0xff]
          %v1209 = vld [vmem:[#allocation7 + $0x8] sm:$0xff]
          %v1210 = vmul.f32 %v1189, %v1208
          %v1211 = vmul.f32 %v1191, %v1209
          %v1212 = vsel %vm1177, %v1205, 0.0
          %1213 = vadd.xlane.f32.xlu0 %v1212
          %v1214 = vpop.xlane.xlu0 %1213
          %v1215 = vsel %vm1177, %v1207, 0.0
          %1216 = vadd.xlane.f32.xlu0 %v1215
          %v1217 = vpop.xlane.xlu0 %1216
          %v1218 = vadd.f32 %v1210, %v1214
          %v1219 = vadd.f32 %v1211, %v1217
          %vm1220 = vcmask 7168
          %1221 = vst.msk [vmem:[#allocation7] sm:$0xff] %vm1220, %v1218
          %1222 = vst.msk [vmem:[#allocation7 + $0x8] sm:$0xff] %vm1220, %v1219
          %v1223 = vld [vmem:[#allocation5] sm:$0xff]
          %v1224 = vld [vmem:[#allocation5 + $0x8] sm:$0xff]
          %1226 = vset.pattern.permute.xlu0 0
          %1227 = vperm.xlu0 %1226, %v1189
          %v1228 = vpop.permute.xlu0 %1227
          %1231 = vset.pattern.permute.xlu0 0
          %1232 = vperm.xlu0 %1231, %v1191
          %v1233 = vpop.permute.xlu0 %1232
          %v1235 = vmul.f32 %v1228, %v1223
          %v1236 = vmul.f32 %v1233, %v1224
          %v1237 = vpack.c.bf16 %v1205, %v1205
          %v1238 = vpack.c.bf16 %v1207, %v1207
          %v1239 = vld [vmem:[#allocation4] sm:$0xf]
          %v1240 = vld [vmem:[#allocation4 + $0x4] sm:$0xf]
          %v1242 = vsel %vm1177, %v1237, 0
          %vm1244 = vcmask 1043456
          %v1246 = vsel %vm1244, %v1239, 0
          %1248 = vmatprep.subr.bf16.mxu0 0
          %1249 = vmatpush1.bf16.msra.mxu0 %v1246
          %1250 = vmatprep.subr.bf16.mxu0 0
          %1251 = vmatpush1.bf16.msra.mxu0 0
          %1252 = vmatprep.subr.bf16.mxu0 0
          %1253 = vmatpush1.bf16.msra.mxu0 0
          %1254 = vmatprep.subr.bf16.mxu0 0
          %1255 = vmatpush1.bf16.msra.mxu0 0
          %1256 = vmatprep.subr.bf16.mxu0 0
          %1257 = vmatpush1.bf16.msra.mxu0 0
          %1258 = vmatprep.subr.bf16.mxu0 0
          %1259 = vmatpush1.bf16.msra.mxu0 0
          %1260 = vmatprep.subr.bf16.mxu0 0
          %1261 = vmatpush1.bf16.msra.mxu0 0
          %1262 = vmatprep.subr.bf16.mxu0 0
          %1263 = vmatpush1.bf16.msra.mxu0 0
          %1264 = vmatprep.subr.bf16.mxu0 0
          %1265 = vmatpush1.bf16.msra.mxu0 0
          %1266 = vmatprep.subr.bf16.mxu0 0
          %1267 = vmatpush1.bf16.msra.mxu0 0
          %1268 = vmatprep.subr.bf16.mxu0 0
          %1269 = vmatpush1.bf16.msra.mxu0 0
          %1270 = vmatprep.subr.bf16.mxu0 0
          %1271 = vmatpush1.bf16.msra.mxu0 0
          %1272 = vmatprep.subr.bf16.mxu0 0
          %1273 = vmatpush1.bf16.msra.mxu0 0
          %1274 = vmatprep.subr.bf16.mxu0 0
          %1275 = vmatpush1.bf16.msra.mxu0 0
          %1276 = vmatprep.subr.bf16.mxu0 0
          %1277 = vmatpush1.bf16.msra.mxu0 0
          %1278 = vmatprep.subr.bf16.mxu0 0
          %1279 = vmatpush1.bf16.msra.mxu0 0
          %1280 = vmatprep.mubr.bf16.mxu0 0
          %1281 = vmatmul.mubr.bf16.gmra.mrb[0].mxu0 %v1242
          %v1282 = vpop.f32.mrb[0].mxu0
          %v1283 = vadd.f32 0.0, %v1282
          %v1284 = vpop.f32.mrb[0].mxu0
          %v1285 = vpop.f32.mrb[0].mxu0
          %v1286 = vpop.f32.mrb[0].mxu0
          %1287 = vdwg.mxu0
          %v1289 = vsel %vm1177, %v1238, 0
          %v1292 = vsel %vm1244, %v1240, 0
          %1294 = vmatprep.subr.bf16.mxu0 0
          %1295 = vmatpush1.bf16.msra.mxu0 %v1292
          %1296 = vmatprep.subr.bf16.mxu0 0
          %1297 = vmatpush1.bf16.msra.mxu0 0
          %1298 = vmatprep.subr.bf16.mxu0 0
          %1299 = vmatpush1.bf16.msra.mxu0 0
          %1300 = vmatprep.subr.bf16.mxu0 0
          %1301 = vmatpush1.bf16.msra.mxu0 0
          %1302 = vmatprep.subr.bf16.mxu0 0
          %1303 = vmatpush1.bf16.msra.mxu0 0
          %1304 = vmatprep.subr.bf16.mxu0 0
          %1305 = vmatpush1.bf16.msra.mxu0 0
          %1306 = vmatprep.subr.bf16.mxu0 0
          %1307 = vmatpush1.bf16.msra.mxu0 0
          %1308 = vmatprep.subr.bf16.mxu0 0
          %1309 = vmatpush1.bf16.msra.mxu0 0
          %1310 = vmatprep.subr.bf16.mxu0 0
          %1311 = vmatpush1.bf16.msra.mxu0 0
          %1312 = vmatprep.subr.bf16.mxu0 0
          %1313 = vmatpush1.bf16.msra.mxu0 0
          %1314 = vmatprep.subr.bf16.mxu0 0
          %1315 = vmatpush1.bf16.msra.mxu0 0
          %1316 = vmatprep.subr.bf16.mxu0 0
          %1317 = vmatpush1.bf16.msra.mxu0 0
          %1318 = vmatprep.subr.bf16.mxu0 0
          %1319 = vmatpush1.bf16.msra.mxu0 0
          %1320 = vmatprep.subr.bf16.mxu0 0
          %1321 = vmatpush1.bf16.msra.mxu0 0
          %1322 = vmatprep.subr.bf16.mxu0 0
          %1323 = vmatpush1.bf16.msra.mxu0 0
          %1324 = vmatprep.subr.bf16.mxu0 0
          %1325 = vmatpush1.bf16.msra.mxu0 0
          %1326 = vmatprep.mubr.bf16.mxu0 0
          %1327 = vmatmul.mubr.bf16.gmra.mrb[0].mxu0 %v1289
          %v1328 = vpop.f32.mrb[0].mxu0
          %v1329 = vadd.f32 0.0, %v1328
          %v1330 = vpop.f32.mrb[0].mxu0
          %v1331 = vpop.f32.mrb[0].mxu0
          %v1332 = vpop.f32.mrb[0].mxu0
          %1333 = vdwg.mxu0
          %v1334 = vadd.f32 %v1235, %v1283
          %v1335 = vadd.f32 %v1236, %v1329
          %1336 = vst.msk [vmem:[#allocation5] sm:$0xff] %vm1068, %v1334
          %1337 = vst.msk [vmem:[#allocation5 + $0x8] sm:$0xff] %vm1068, %v1335
          %1338 = vst.msk [vmem:[#allocation6] sm:$0xff] %vm1220, %v1184
          %1339 = vst.msk [vmem:[#allocation6 + $0x8] sm:$0xff] %vm1220, %v1185
        $region100: #{tpu_custom_call.1} parent=91 // pred_fallthru
          _
        // Predicated region
        $region101: #{tpu_custom_call.1} parent=91 // pred_check
          %p1340 = pneg %p634
        $region102: #{tpu_custom_call.1} parent=91 // pred_check_branch
          %1342 = sbr.rel (%p1340) target = $region104
        $region103: #{tpu_custom_call.1} parent=91 // pred_region
          %v1343 = vld [vmem:[%s623] sm:$0xff]
          %v1344 = vld [vmem:[#allocation5] sm:$0xff]
          %v1345 = vld [vmem:[#allocation5 + $0x8] sm:$0xff]
          %v1346 = vld [vmem:[#allocation7] sm:$0xff]
          %v1347 = vld [vmem:[#allocation7 + $0x8] sm:$0xff]
          %v1348 = vrcp.pop %v1346
          %v1349 = vrcp.pop %v1347
          %1351 = vset.pattern.permute.xlu0 0
          %1352 = vperm.xlu0 %1351, %v1348
          %v1353 = vpop.permute.xlu0 %1352
          %1356 = vset.pattern.permute.xlu0 0
          %1357 = vperm.xlu0 %1356, %v1349
          %v1358 = vpop.permute.xlu0 %1357
          %v1360 = vmul.f32 %v1344, %v1353
          %v1361 = vmul.f32 %v1345, %v1358
          %v1362 = vpack.c.bf16 %v1360, %v1360
          %v1363 = vpack.c.bf16 %v1361, %v1361
          %v1364 = vld [vmem:[%s8] sm:$0xf]
          %v1365 = vld [vmem:[%s8 + $0x4] sm:$0xf]
          %s1366 = scalar_lea.vmem %s8, 8
          %v1367 = vld [vmem:[%s1366] sm:$0xf]
          %v1368 = vld [vmem:[%s1366 + $0x4] sm:$0xf]
          %v1371 = vunpack.c.l.b16 %v1367
          %v1372 = vunpack.c.l.b16 %v1368
          %v1373 = vpack.c.b16 %v1372, %v1371
          %vm1375 = vcmask 130048
          %v1377 = vsel %vm1375, %v1363, 0
          %1379 = vmatprep.subr.bf16.mxu0 0
          %1380 = vmatpush1.bf16.msra.mxu0 %v1373
          %1381 = vmatprep.subr.bf16.mxu0 0
          %1382 = vmatpush1.bf16.msra.mxu0 0
          %1383 = vmatprep.subr.bf16.mxu0 0
          %1384 = vmatpush1.bf16.msra.mxu0 0
          %1385 = vmatprep.subr.bf16.mxu0 0
          %1386 = vmatpush1.bf16.msra.mxu0 0
          %1387 = vmatprep.subr.bf16.mxu0 0
          %1388 = vmatpush1.bf16.msra.mxu0 0
          %1389 = vmatprep.subr.bf16.mxu0 0
          %1390 = vmatpush1.bf16.msra.mxu0 0
          %1391 = vmatprep.subr.bf16.mxu0 0
          %1392 = vmatpush1.bf16.msra.mxu0 0
          %1393 = vmatprep.subr.bf16.mxu0 0
          %1394 = vmatpush1.bf16.msra.mxu0 0
          %1395 = vmatprep.subr.bf16.mxu0 0
          %1396 = vmatpush1.bf16.msra.mxu0 0
          %1397 = vmatprep.subr.bf16.mxu0 0
          %1398 = vmatpush1.bf16.msra.mxu0 0
          %1399 = vmatprep.subr.bf16.mxu0 0
          %1400 = vmatpush1.bf16.msra.mxu0 0
          %1401 = vmatprep.subr.bf16.mxu0 0
          %1402 = vmatpush1.bf16.msra.mxu0 0
          %1403 = vmatprep.subr.bf16.mxu0 0
          %1404 = vmatpush1.bf16.msra.mxu0 0
          %1405 = vmatprep.subr.bf16.mxu0 0
          %1406 = vmatpush1.bf16.msra.mxu0 0
          %1407 = vmatprep.subr.bf16.mxu0 0
          %1408 = vmatpush1.bf16.msra.mxu0 0
          %1409 = vmatprep.subr.bf16.mxu0 0
          %1410 = vmatpush1.bf16.msra.mxu0 0
          %1411 = vmatprep.mubr.bf16.mxu0 0
          %1412 = vmatmul.mubr.bf16.gmra.mrb[0].mxu0 %v1377
          %v1413 = vpop.f32.mrb[0].mxu0
          %v1414 = vadd.f32 0.0, %v1413
          %v1415 = vpop.f32.mrb[0].mxu0
          %v1416 = vpop.f32.mrb[0].mxu0
          %v1417 = vpop.f32.mrb[0].mxu0
          %1418 = vdwg.mxu0
          %v1421 = vunpack.c.l.b16 %v1364
          %v1422 = vunpack.c.l.b16 %v1365
          %v1423 = vpack.c.b16 %v1422, %v1421
          %v1426 = vsel %vm1375, %v1362, 0
          %1428 = vmatprep.subr.bf16.mxu0 0
          %1429 = vmatpush1.bf16.msra.mxu0 %v1423
          %1430 = vmatprep.subr.bf16.mxu0 0
          %1431 = vmatpush1.bf16.msra.mxu0 0
          %1432 = vmatprep.subr.bf16.mxu0 0
          %1433 = vmatpush1.bf16.msra.mxu0 0
          %1434 = vmatprep.subr.bf16.mxu0 0
          %1435 = vmatpush1.bf16.msra.mxu0 0
          %1436 = vmatprep.subr.bf16.mxu0 0
          %1437 = vmatpush1.bf16.msra.mxu0 0
          %1438 = vmatprep.subr.bf16.mxu0 0
          %1439 = vmatpush1.bf16.msra.mxu0 0
          %1440 = vmatprep.subr.bf16.mxu0 0
          %1441 = vmatpush1.bf16.msra.mxu0 0
          %1442 = vmatprep.subr.bf16.mxu0 0
          %1443 = vmatpush1.bf16.msra.mxu0 0
          %1444 = vmatprep.subr.bf16.mxu0 0
          %1445 = vmatpush1.bf16.msra.mxu0 0
          %1446 = vmatprep.subr.bf16.mxu0 0
          %1447 = vmatpush1.bf16.msra.mxu0 0
          %1448 = vmatprep.subr.bf16.mxu0 0
          %1449 = vmatpush1.bf16.msra.mxu0 0
          %1450 = vmatprep.subr.bf16.mxu0 0
          %1451 = vmatpush1.bf16.msra.mxu0 0
          %1452 = vmatprep.subr.bf16.mxu0 0
          %1453 = vmatpush1.bf16.msra.mxu0 0
          %1454 = vmatprep.subr.bf16.mxu0 0
          %1455 = vmatpush1.bf16.msra.mxu0 0
          %1456 = vmatprep.subr.bf16.mxu0 0
          %1457 = vmatpush1.bf16.msra.mxu0 0
          %1458 = vmatprep.subr.bf16.mxu0 0
          %1459 = vmatpush1.bf16.msra.mxu0 0
          %1460 = vmatprep.mubr.bf16.mxu0 0
          %1461 = vmatmul.mubr.bf16.gmra.mrb[0].mxu0 %v1426
          %v1462 = vpop.f32.mrb[0].mxu0
          %v1463 = vadd.f32 %v1414, %v1462
          %v1464 = vpop.f32.mrb[0].mxu0
          %v1465 = vpop.f32.mrb[0].mxu0
          %v1466 = vpop.f32.mrb[0].mxu0
          %1467 = vdwg.mxu0
          %v1468 = vld [vmem:[%s9] sm:$0x1]
          %v1470 = vlaneseq
          %v1471 = vshrl.u32 %v1470, 7
          %v1472 = vsub.s32 0, %v1471
          %v1473 = vrot.slane %v1468, %v1472
          %v1475 = vadd.f32 %v1463, %v1473
          %v1476 = vadd.f32 %v1343, %v1475
          %v1477 = vld [vmem:[%s10] sm:$0x1]
          %v1478 = vld [vmem:[%s11] sm:$0x1]
          %vm1479 = vcmask 261120
          %v1480 = vsel %vm1479, %v1476, 0.0
          %1481 = vadd.xlane.f32.xlu0 %v1480
          %v1482 = vpop.xlane.xlu0 %1481
          %v1483 = vrcp.pop 32.0
          %v1484 = vmul.f32 %v1482, %v1483
          %v1485 = vsub.f32 %v1476, %v1484
          %v1486 = vmul.f32 %v1485, %v1485
          %v1487 = vsel %vm1479, %v1486, 0.0
          %1488 = vadd.xlane.f32.xlu0 %v1487
          %v1489 = vpop.xlane.xlu0 %1488
          %v1490 = vmul.f32 %v1489, %v1483
          %v1491 = vadd.f32 %v1490, 1e-05
          %v1492 = vrsqrt.pop %v1491
          %v1493 = vmul.f32 %v1485, %v1492
          %v1495 = vlaneseq
          %v1496 = vshrl.u32 %v1495, 7
          %v1497 = vsub.s32 0, %v1496
          %v1498 = vrot.slane %v1477, %v1497
          %v1500 = vmul.f32 %v1493, %v1498
          %v1502 = vlaneseq
          %v1503 = vshrl.u32 %v1502, 7
          %v1504 = vsub.s32 0, %v1503
          %v1505 = vrot.slane %v1478, %v1504
          %v1507 = vadd.f32 %v1500, %v1505
          %v1508 = vpack.c.bf16 %v1507, %v1507
          %v1509 = vld [vmem:[%s12] sm:$0xf]
          %v1510 = vld [vmem:[%s12 + $0x4] sm:$0xf]
          %v1511 = vld [vmem:[%s12 + $0x8] sm:$0xf]
          %v1512 = vld [vmem:[%s12 + $0xc] sm:$0xf]
          %v1513 = vld [vmem:[%s13] sm:$0x1]
          %v1515 = vlaneseq
          %v1516 = vshrl.u32 %v1515, 7
          %v1517 = vsub.s32 0, %v1516
          %v1518 = vrot.slane %v1513, %v1517
          %v1524 = vunpack.c.l.b16 %v1509
          %v1525 = vunpack.c.l.b16 %v1510
          %v1526 = vunpack.c.l.b16 %v1511
          %v1527 = vunpack.c.l.b16 %v1512
          %v1528 = vpack.c.b16 %v1525, %v1524
          %v1529 = vpack.c.b16 %v1527, %v1526
          %v1533 = vsel %vm1479, %v1508, 0
          %1535 = vmatprep.subr.bf16.mxu0 0
          %1536 = vmatpush1.bf16.msra.mxu0 %v1528
          %1537 = vmatprep.subr.bf16.mxu0 0
          %1538 = vmatpush1.bf16.msra.mxu0 %v1529
          %1539 = vmatprep.subr.bf16.mxu0 0
          %1540 = vmatpush1.bf16.msra.mxu0 0
          %1541 = vmatprep.subr.bf16.mxu0 0
          %1542 = vmatpush1.bf16.msra.mxu0 0
          %1543 = vmatprep.subr.bf16.mxu0 0
          %1544 = vmatpush1.bf16.msra.mxu0 0
          %1545 = vmatprep.subr.bf16.mxu0 0
          %1546 = vmatpush1.bf16.msra.mxu0 0
          %1547 = vmatprep.subr.bf16.mxu0 0
          %1548 = vmatpush1.bf16.msra.mxu0 0
          %1549 = vmatprep.subr.bf16.mxu0 0
          %1550 = vmatpush1.bf16.msra.mxu0 0
          %1551 = vmatprep.subr.bf16.mxu0 0
          %1552 = vmatpush1.bf16.msra.mxu0 0
          %1553 = vmatprep.subr.bf16.mxu0 0
          %1554 = vmatpush1.bf16.msra.mxu0 0
          %1555 = vmatprep.subr.bf16.mxu0 0
          %1556 = vmatpush1.bf16.msra.mxu0 0
          %1557 = vmatprep.subr.bf16.mxu0 0
          %1558 = vmatpush1.bf16.msra.mxu0 0
          %1559 = vmatprep.subr.bf16.mxu0 0
          %1560 = vmatpush1.bf16.msra.mxu0 0
          %1561 = vmatprep.subr.bf16.mxu0 0
          %1562 = vmatpush1.bf16.msra.mxu0 0
          %1563 = vmatprep.subr.bf16.mxu0 0
          %1564 = vmatpush1.bf16.msra.mxu0 0
          %1565 = vmatprep.subr.bf16.mxu0 0
          %1566 = vmatpush1.bf16.msra.mxu0 0
          %1567 = vmatprep.mubr.bf16.mxu0 0
          %1568 = vmatmul.mubr.bf16.gmra.mrb[0].mxu0 %v1533
          %v1569 = vpop.f32.mrb[0].mxu0
          %v1570 = vadd.f32 %v1518, %v1569
          %v1571 = vpop.f32.mrb[0].mxu0
          %v1572 = vpop.f32.mrb[0].mxu0
          %v1573 = vpop.f32.mrb[0].mxu0
          %1574 = vdwg.mxu0
          %v1575 = vmax.f32 %v1570, 0.0
          %v1576 = vpack.c.bf16 %v1575, %v1575
          %v1577 = vld [vmem:[%s14] sm:$0xf]
          %v1578 = vld [vmem:[%s14 + $0x4] sm:$0xf]
          %v1579 = vld [vmem:[%s14 + $0x8] sm:$0xf]
          %v1580 = vld [vmem:[%s14 + $0xc] sm:$0xf]
          %v1581 = vld [vmem:[%s14 + $0x10] sm:$0xf]
          %v1582 = vld [vmem:[%s14 + $0x14] sm:$0xf]
          %v1583 = vld [vmem:[%s14 + $0x18] sm:$0xf]
          %v1584 = vld [vmem:[%s14 + $0x1c] sm:$0xf]
          %v1585 = vld [vmem:[%s15] sm:$0x1]
          %v1587 = vlaneseq
          %v1588 = vshrl.u32 %v1587, 7
          %v1589 = vsub.s32 0, %v1588
          %v1590 = vrot.slane %v1585, %v1589
          %v1600 = vunpack.c.l.b16 %v1577
          %v1601 = vunpack.c.l.b16 %v1578
          %v1602 = vunpack.c.l.b16 %v1579
          %v1603 = vunpack.c.l.b16 %v1580
          %v1604 = vunpack.c.l.b16 %v1581
          %v1605 = vunpack.c.l.b16 %v1582
          %v1606 = vunpack.c.l.b16 %v1583
          %v1607 = vunpack.c.l.b16 %v1584
          %v1608 = vpack.c.b16 %v1601, %v1600
          %v1609 = vpack.c.b16 %v1603, %v1602
          %v1610 = vpack.c.b16 %v1605, %v1604
          %v1611 = vpack.c.b16 %v1607, %v1606
          %vm1616 = vcmask 523264
          %v1618 = vsel %vm1616, %v1576, 0
          %1620 = vmatprep.subr.bf16.mxu0 0
          %1621 = vmatpush1.bf16.msra.mxu0 %v1608
          %1622 = vmatprep.subr.bf16.mxu0 0
          %1623 = vmatpush1.bf16.msra.mxu0 %v1609
          %1624 = vmatprep.subr.bf16.mxu0 0
          %1625 = vmatpush1.bf16.msra.mxu0 %v1610
          %1626 = vmatprep.subr.bf16.mxu0 0
          %1627 = vmatpush1.bf16.msra.mxu0 %v1611
          %1628 = vmatprep.subr.bf16.mxu0 0
          %1629 = vmatpush1.bf16.msra.mxu0 0
          %1630 = vmatprep.subr.bf16.mxu0 0
          %1631 = vmatpush1.bf16.msra.mxu0 0
          %1632 = vmatprep.subr.bf16.mxu0 0
          %1633 = vmatpush1.bf16.msra.mxu0 0
          %1634 = vmatprep.subr.bf16.mxu0 0
          %1635 = vmatpush1.bf16.msra.mxu0 0
          %1636 = vmatprep.subr.bf16.mxu0 0
          %1637 = vmatpush1.bf16.msra.mxu0 0
          %1638 = vmatprep.subr.bf16.mxu0 0
          %1639 = vmatpush1.bf16.msra.mxu0 0
          %1640 = vmatprep.subr.bf16.mxu0 0
          %1641 = vmatpush1.bf16.msra.mxu0 0
          %1642 = vmatprep.subr.bf16.mxu0 0
          %1643 = vmatpush1.bf16.msra.mxu0 0
          %1644 = vmatprep.subr.bf16.mxu0 0
          %1645 = vmatpush1.bf16.msra.mxu0 0
          %1646 = vmatprep.subr.bf16.mxu0 0
          %1647 = vmatpush1.bf16.msra.mxu0 0
          %1648 = vmatprep.subr.bf16.mxu0 0
          %1649 = vmatpush1.bf16.msra.mxu0 0
          %1650 = vmatprep.subr.bf16.mxu0 0
          %1651 = vmatpush1.bf16.msra.mxu0 0
          %1652 = vmatprep.mubr.bf16.mxu0 0
          %1653 = vmatmul.mubr.bf16.gmra.mrb[0].mxu0 %v1618
          %v1654 = vpop.f32.mrb[0].mxu0
          %v1655 = vadd.f32 %v1590, %v1654
          %v1656 = vpop.f32.mrb[0].mxu0
          %v1657 = vpop.f32.mrb[0].mxu0
          %v1658 = vpop.f32.mrb[0].mxu0
          %1659 = vdwg.mxu0
          %v1660 = vadd.f32 %v1507, %v1655
          %v1661 = vld [vmem:[%s16] sm:$0x1]
          %v1662 = vld [vmem:[%s17] sm:$0x1]
          %v1663 = vsel %vm1479, %v1660, 0.0
          %1664 = vadd.xlane.f32.xlu0 %v1663
          %v1665 = vpop.xlane.xlu0 %1664
          %v1666 = vmul.f32 %v1665, %v1483
          %v1667 = vsub.f32 %v1660, %v1666
          %v1668 = vmul.f32 %v1667, %v1667
          %v1669 = vsel %vm1479, %v1668, 0.0
          %1670 = vadd.xlane.f32.xlu0 %v1669
          %v1671 = vpop.xlane.xlu0 %1670
          %v1672 = vmul.f32 %v1671, %v1483
          %v1673 = vadd.f32 %v1672, 1e-05
          %v1674 = vrsqrt.pop %v1673
          %v1675 = vmul.f32 %v1667, %v1674
          %v1677 = vlaneseq
          %v1678 = vshrl.u32 %v1677, 7
          %v1679 = vsub.s32 0, %v1678
          %v1680 = vrot.slane %v1661, %v1679
          %v1682 = vmul.f32 %v1675, %v1680
          %v1684 = vlaneseq
          %v1685 = vshrl.u32 %v1684, 7
          %v1686 = vsub.s32 0, %v1685
          %v1687 = vrot.slane %v1662, %v1686
          %v1689 = vadd.f32 %v1682, %v1687
          %1690 = vst.msk [vmem:[%s616] sm:$0xff] %vm1479, %v1689
        $region104: #{tpu_custom_call.1} parent=91 // pred_fallthru
          _
        %s1691 = sand.u32 %s453, 1
        %s1692 = scalar_lea.sflag [#allocation9], %s1691
        %s1693 = sand.u32 %s453, 1
        %s1694 = smul.addr %s1693, 8
        %s1695 = scalar_lea.vmem [#allocation8], %s1694
        // Predicated region
        $region105: #{tpu_custom_call.1} parent=91 // pred_check
          %p1696 = pneg %p463
        $region106: #{tpu_custom_call.1} parent=91 // pred_check_branch
          %1698 = sbr.rel (%p1696) target = $region108
        $region107: #{tpu_custom_call.1} parent=91 // pred_region
          %s1700 = ssub.s32 128, 128
          %1701 = vsyncadd %s1692, %s1700
          %s1702 = sadd.s32 %s38, %s37
          %s1703 = smul.addr %s1702, 128
          %s1704 = scalar_lea.hbm %s18, %s1703
          %s1706 = sshll.u32 %s1695, 4
          %s1707 = int_to_ptr.vmem [resolvable:$true] %s1706
          %1709 = dma.vmem_to_hbm [thread:$0]  %s1707, 128, %s1704, %s1692
        $region108: #{tpu_custom_call.1} parent=91 // pred_fallthru
          _
      $region92: #{tpu_custom_call.1} parent=5 // pred_fallthru
        _
      %p1710 = scmp.le.s32.totalorder 2, %s27
      // Predicated region
      $region109: #{tpu_custom_call.1} parent=5 // pred_check
        %p1711 = pneg %p1710
      $region110: #{tpu_custom_call.1} parent=5 // pred_check_branch
        %1713 = sbr.rel (%p1711) target = $region112
      $region111: #{tpu_custom_call.1} parent=5 // pred_region
        %s1714 = ssub.s32 %s27, 2
        // Predicated region
        $region113: #{tpu_custom_call.1} parent=111 // pred_check
          %p1715 = pneg %p469
        $region114: #{tpu_custom_call.1} parent=111 // pred_check_branch
          %1717 = sbr.rel (%p1715) target = $region116
        $region115: #{tpu_custom_call.1} parent=111 // pred_region
          %s1718 = sand.u32 %s454, 1
          %s1719 = scalar_lea.sflag [#allocation9], %s1718
          %s1720 = sand.u32 %s454, 1
          %s1721 = smul.addr %s1720, 8
          %s1722 = scalar_lea.vmem [#allocation8], %s1721
          %1723 = dma.done %s1719, 128
        $region116: #{tpu_custom_call.1} parent=111 // pred_fallthru
          _
      $region112: #{tpu_custom_call.1} parent=5 // pred_fallthru
        _
    $region6: #{tpu_custom_call.1} parent=1 // loop_footer
      %s31 = sadd.s32 1, %s27
    $region7: #{tpu_custom_call.1} parent=1 // loop_footer_branch
      %26 = sbr.rel target = $region3
    $region8: #{tpu_custom_call.1} parent=1 // loop_exit
      _
    %1724 = vsyncpa [#allocation9], 1
    %s1725 = scalar_lea.sflag [#allocation9], 1
    %1726 = vsyncpa %s1725, 1

</llo_original>
